<compile_context>
chip_gen: v6e
topology: v6e:2x2x1
jax: 0.10.0
libtpu: 0.0.40
codegen_flags: <defaults>
</compile_context>

<pallas_src>
import numpy as np
import jax
import jax.numpy as jnp
from jax.experimental import pallas as pl
from jax.experimental.pallas import tpu as pltpu


def _ru(x, m):
    return (x + m - 1) // m * m


# ------------------------------------------------------------------------------ kernel
def _bottleneck_kernel(xcol_ref, xres_ref, mask_ref, w1_ref, b1_ref, w2_ref, b2_ref,
                       w3_ref, b3_ref, o_ref):
    """One image per grid step. Whole bottleneck fused; no gather/selection matmuls.

    xcol_ref : (9*TAP, Cin) bf16  host-side im2col of the doubly-padded input grid
                                  (tap-major; rows >= Ho*Wo inside a tap block are zero)
    xres_ref : (2*TAP, C4)  f32   residual x in output-row layout (interior | junk | ring)
    mask_ref : (9*TAP, 1)   f32   1 for real/conv1-pad rows, 0 for conv2 zero-pad rows
    w1_ref   : (Cin, CP)    bf16  conv1 1x1 weight with bn1 scale folded in
    b1_ref   : (1, CP)      f32   folded bn1 bias
    w2_ref   : (9, CP, CP)  bf16  conv2 per-tap weights with bn2 scale folded in
    b2_ref   : (1, CP)      f32   folded bn2 bias
    w3_ref   : (CP, C4)     bf16  conv3 1x1 weight with bn3 scale folded in
    b3_ref   : (1, C4)      f32   folded bn3 bias
    o_ref    : (2*TAP, C4)  f32   output rows (same layout as xres)
    """
    f32, bf16 = jnp.float32, jnp.bfloat16
    n_taps = w2_ref.shape[0]
    tap = xcol_ref.shape[0] // n_taps
    cp = w1_ref.shape[1]

    # conv1 (1x1) + bn1 + relu over all im2col rows. Rows belonging to conv2's zero-pad
    # ring must stay exactly 0 (not relu(b1)) -> multiply by the 0/1 row mask.
    h1 = jnp.dot(xcol_ref[...], w1_ref[...], preferred_element_type=f32) + b1_ref[...]
    h1 = (jnp.maximum(h1, 0.0) * mask_ref[...]).astype(bf16)

    # conv2 (3x3, stride 2) + bn2 + relu: each tap is a tile-aligned static row block of
    # h1 (the host already laid the stride-2 windows out contiguously). Accumulator is
    # seeded with the folded bn2 bias.
    acc = jnp.broadcast_to(b2_ref[...], (tap, cp))
    for t in range(n_taps):
        acc = acc + jnp.dot(h1[t * tap:(t + 1) * tap, :], w2_ref[t],
                            preferred_element_type=f32)
    y2 = jnp.maximum(acc, 0.0).astype(bf16)     # rows >= Ho*Wo are junk, never gathered

    # conv3 (1x1) + bn3 + identity + relu. Output rows [0, tap): interior pixels;
    # rows [tap, 2*tap): the conv3 pad ring (conv contributes 0 there) + junk/pad rows.
    z3 = jnp.dot(y2, w3_ref[...], preferred_element_type=f32)
    b3 = b3_ref[...]
    o_ref[0:tap, :] = jnp.maximum(z3 + b3 + xres_ref[0:tap, :], 0.0)
    o_ref[tap:, :] = jnp.maximum(b3 + xres_ref[tap:, :], 0.0)


# ------------------------------------------------------------------------------ builder
def build_bottleneck(params, N, H, W, in_channel, out_channel, expansion=4):
    """Fold BN, build index tables ONCE (outside jit), return a jitted forward(x_nchw)."""
    C, Cin, C4 = out_channel, in_channel, out_channel * expansion
    if Cin != C4:
        raise ValueError("literal forward (downsample=None) needs in_channel == 4*out_channel")

    H1, W1 = H + 2, W + 2                         # conv1 output spatial (1x1, pad=1)
    Hp, Wp = H1 + 2, W1 + 2                       # conv2 zero-padded input spatial
    Ho, Wo = (Hp - 3) // 2 + 1, (Wp - 3) // 2 + 1  # conv2 output (3x3, stride 2)
    if (Ho + 2, Wo + 2) != (H, W):
        raise ValueError("residual add (downsample=None) only shape-checks for H=W=7")

    CP = _ru(C, 16)                               # mid channels padded 8 -> 16
    TAP = _ru(Ho * Wo, 16)                        # rows per tap block (25 -> 32)
    R_COL = 9 * TAP                               # im2col rows per image
    R_OUT = 2 * TAP                               # output rows per image
    n_ring = H * W - Ho * Wo
    assert TAP + n_ring <= R_OUT

    # ---- host-side index tables (numpy, built once per geometry) -----------------
    col_idx = np.zeros((R_COL,), np.int32)        # which x pixel feeds each im2col row
    col_val = np.zeros((R_COL,), np.float32)      # 0 for synthetic (padding) rows
    mask = np.zeros((R_COL, 1), np.float32)       # 0 only for conv2 zero-pad rows
    for di in range(3):
        for dj in range(3):
            t = di * 3 + dj
            for oi in range(Ho):
                for oj in range(Wo):
                    r = t * TAP + oi * Wo + oj
                    a, b = 2 * oi + di, 2 * oj + dj        # position in the Hp x Wp grid
                    if 2 <= a <= H + 1 and 2 <= b <= W + 1:        # real input pixel
                        col_idx[r] = (a - 2) * W + (b - 2)
                        col_val[r] = 1.0
                        mask[r, 0] = 1.0
                    elif 1 <= a <= Hp - 2 and 1 <= b <= Wp - 2:    # conv1 pad -> relu(b1)
                        mask[r, 0] = 1.0
                    # else: conv2 zero-pad ring -> stays exactly 0 (mask = 0)

    res_idx = np.zeros((R_OUT,), np.int32)        # residual x pixel per output row
    res_val = np.zeros((R_OUT,), np.float32)
    out_gather = np.zeros((H * W,), np.int32)     # output row for each (u, v)
    for oi in range(Ho):                          # interior rows [0, Ho*Wo)
        for oj in range(Wo):
            r = oi * Wo + oj
            u, v = oi + 1, oj + 1
            res_idx[r] = u * W + v
            res_val[r] = 1.0
            out_gather[u * W + v] = r
    k = 0                                         # ring rows [TAP, TAP + n_ring)
    for u in range(H):
        for v in range(W):
            if 1 <= u <= Ho and 1 <= v <= Wo:
                continue
            r = TAP + k
            res_idx[r] = u * W + v
            res_val[r] = 1.0
            out_gather[u * W + v] = r
            k += 1

    col_idx, col_val = jnp.asarray(col_idx), jnp.asarray(col_val)
    res_idx, res_val = jnp.asarray(res_idx), jnp.asarray(res_val)
    out_gather = jnp.asarray(out_gather)
    mask = jnp.asarray(mask)

    # ---- fold BN (eval mode) into conv weights, pad mid channels to CP -----------
    def fold(g, be, m, v, eps=1e-5):
        s = g * jax.lax.rsqrt(v + eps)
        return s, be - m * s

    s1, b1 = fold(params["g1"], params["be1"], params["m1"], params["v1"])
    s2, b2 = fold(params["g2"], params["be2"], params["m2"], params["v2"])
    s3, b3 = fold(params["g3"], params["be3"], params["m3"], params["v3"])

    bf = jnp.bfloat16
    w1 = params["w1"][:, :, 0, 0].T * s1[None, :]                       # (Cin, C)
    w1 = jnp.pad(w1, ((0, 0), (0, CP - C))).astype(bf)                  # (Cin, CP)
    w2 = jnp.transpose(params["w2"], (2, 3, 1, 0)).reshape(9, C, C) * s2[None, None, :]
    w2 = jnp.pad(w2, ((0, 0), (0, CP - C), (0, CP - C))).astype(bf)     # (9, CP, CP)
    w3 = params["w3"][:, :, 0, 0].T * s3[None, :]                       # (C, C4)
    w3 = jnp.pad(w3, ((0, CP - C), (0, 0))).astype(bf)                  # (CP, C4)
    b1 = jnp.pad(b1, (0, CP - C)).reshape(1, CP).astype(jnp.float32)
    b2 = jnp.pad(b2, (0, CP - C)).reshape(1, CP).astype(jnp.float32)
    b3 = b3.reshape(1, C4).astype(jnp.float32)

    run = pl.pallas_call(
        _bottleneck_kernel,
        out_shape=jax.ShapeDtypeStruct((N * R_OUT, C4), jnp.float32),
        grid=(N,),
        in_specs=[
            pl.BlockSpec((R_COL, Cin), lambda n: (n, 0)),      # xcol (per image)
            pl.BlockSpec((R_OUT, C4), lambda n: (n, 0)),       # xres (per image)
            pl.BlockSpec((R_COL, 1), lambda n: (0, 0)),        # mask (VMEM-resident)
            pl.BlockSpec((Cin, CP), lambda n: (0, 0)),         # w1
            pl.BlockSpec((1, CP), lambda n: (0, 0)),           # b1
            pl.BlockSpec((9, CP, CP), lambda n: (0, 0, 0)),    # w2
            pl.BlockSpec((1, CP), lambda n: (0, 0)),           # b2
            pl.BlockSpec((CP, C4), lambda n: (0, 0)),          # w3
            pl.BlockSpec((1, C4), lambda n: (0, 0)),           # b3
        ],
        out_specs=pl.BlockSpec((R_OUT, C4), lambda n: (n, 0)),
        compiler_params=pltpu.CompilerParams(dimension_semantics=("parallel",)),
    )

    @jax.jit
    def forward(x_nchw):
        x = jnp.transpose(x_nchw, (0, 2, 3, 1)).reshape(N, H * W, Cin)   # NHWC pixel rows
        xcol = (x[:, col_idx, :] * col_val[None, :, None]).astype(bf)
        xcol = xcol.reshape(N * R_COL, Cin)
        xres = (x[:, res_idx, :] * res_val[None, :, None]).astype(jnp.float32)
        xres = xres.reshape(N * R_OUT, C4)
        out = run(xcol, xres, mask, w1, b1, w2, b2, w3, b3)
        out = out.reshape(N, R_OUT, C4)[:, out_gather, :].reshape(N, H, W, C4)
        return jnp.transpose(out, (0, 3, 1, 2))

    return forward


# ------------------------------------------------------------------------------ reference
def _reference(x_nchw, p):
    """Pure-XLA f32 reference of the same forward (eval-mode BN)."""
    x = jnp.transpose(x_nchw, (0, 2, 3, 1)).astype(jnp.float32)

    def conv(inp, w, stride, pad):
        return jax.lax.conv_general_dilated(
            inp, jnp.transpose(w, (2, 3, 1, 0)).astype(jnp.float32),
            (stride, stride), [(pad, pad), (pad, pad)],
            dimension_numbers=("NHWC", "HWIO", "NHWC"),
            precision=jax.lax.Precision.HIGHEST)

    def bn(z, g, be, m, v, eps=1e-5):
        return (z - m) * (g / jnp.sqrt(v + eps)) + be

    h = jax.nn.relu(bn(conv(x, p["w1"], 1, 1), p["g1"], p["be1"], p["m1"], p["v1"]))
    h = jax.nn.relu(bn(conv(h, p["w2"], 2, 1), p["g2"], p["be2"], p["m2"], p["v2"]))
    h = bn(conv(h, p["w3"], 1, 1), p["g3"], p["be3"], p["m3"], p["v3"])
    return jnp.transpose(jax.nn.relu(h + x), (0, 3, 1, 2))


# ------------------------------------------------------------------------------ params
def init_params(key, in_channel, out_channel):
    expansion = 4
    ks = jax.random.split(key, 16)
    C, Cin, C4 = out_channel, in_channel, out_channel * expansion
    return {
        "w1": jax.random.normal(ks[0], (C, Cin, 1, 1), jnp.float32) * 0.1,
        "w2": jax.random.normal(ks[1], (C, C, 3, 3), jnp.float32) * 0.1,
        "w3": jax.random.normal(ks[2], (C4, C, 1, 1), jnp.float32) * 0.1,
        "g1": jax.random.uniform(ks[3], (C,), jnp.float32, 0.5, 1.5),
        "be1": jax.random.normal(ks[4], (C,), jnp.float32) * 0.1,
        "m1": jax.random.normal(ks[5], (C,), jnp.float32) * 0.1,
        "v1": jax.random.uniform(ks[6], (C,), jnp.float32, 0.5, 1.5),
        "g2": jax.random.uniform(ks[7], (C,), jnp.float32, 0.5, 1.5),
        "be2": jax.random.normal(ks[8], (C,), jnp.float32) * 0.1,
        "m2": jax.random.normal(ks[9], (C,), jnp.float32) * 0.1,
        "v2": jax.random.uniform(ks[10], (C,), jnp.float32, 0.5, 1.5),
        "g3": jax.random.uniform(ks[11], (C4,), jnp.float32, 0.5, 1.5),
        "be3": jax.random.normal(ks[12], (C4,), jnp.float32) * 0.1,
        "m3": jax.random.normal(ks[13], (C4,), jnp.float32) * 0.1,
        "v3": jax.random.uniform(ks[14], (C4,), jnp.float32, 0.5, 1.5),
    }


# ------------------------------------------------------------------------------ main
if __name__ == "__main__":
    key = jax.random.PRNGKey(0)
    k_x, k_p = jax.random.split(key)

    # shapes chosen so the literal forward (downsample=None, pad=1 on 1x1 convs,
    # stride=2 on conv2) produces a residual-compatible output:
    # in_channel = 4*out_channel, H = W = 7 -> output is (N, 4*out_channel, 7, 7)
    N, in_channel, out_channel, H, W = 2, 32, 8, 7, 7

    x = jax.random.normal(k_x, (N, in_channel, H, W), jnp.float32)
    params = init_params(k_p, in_channel, out_channel)

    forward = build_bottleneck(params, N, H, W, in_channel, out_channel)
    out = forward(x)
    jax.block_until_ready(out)
    assert out.shape == (N, out_channel * 4, H, W), out.shape

    # sanity check against a pure-XLA f32 reference (kernel uses bf16 MXU, f32 accum)
    ref = _reference(x, params)
    err = float(jnp.max(jnp.abs(out - ref)))
    assert err < 1e-1, f"max |err| vs reference = {err}"

    print("KERNEL_OK")
</pallas_src>

<mosaic_0001>
module attributes {stable_mosaic.version = 11 : i64} {
  func.func @_bottleneck_kernel(%arg0: i32, %arg1: memref<288x32xbf16, #tpu.memory_space<vmem>>, %arg2: memref<64x32xf32, #tpu.memory_space<vmem>>, %arg3: memref<288x1xf32, #tpu.memory_space<vmem>>, %arg4: memref<32x16xbf16, #tpu.memory_space<vmem>>, %arg5: memref<1x16xf32, #tpu.memory_space<vmem>>, %arg6: memref<9x16x16xbf16, #tpu.memory_space<vmem>>, %arg7: memref<1x16xf32, #tpu.memory_space<vmem>>, %arg8: memref<16x32xbf16, #tpu.memory_space<vmem>>, %arg9: memref<1x32xf32, #tpu.memory_space<vmem>>, %arg10: memref<64x32xf32, #tpu.memory_space<vmem>>) attributes {dimension_semantics = [#tpu.dimension_semantics<parallel>], iteration_bounds = array<i64: 2>, scalar_prefetch = 0 : i64, scratch_operands = 0 : i64, tpu.core_type = #tpu.core_type<tc>, window_params = [{transform_indices = @transform_0, window_bounds = array<i64: 288, 32>}, {transform_indices = @transform_1, window_bounds = array<i64: 64, 32>}, {pipeline_mode = #tpu.pipeline_mode<synchronous>, transform_indices = @transform_2, window_bounds = array<i64: 288, 1>}, {pipeline_mode = #tpu.pipeline_mode<synchronous>, transform_indices = @transform_3, window_bounds = array<i64: 32, 16>}, {pipeline_mode = #tpu.pipeline_mode<synchronous>, transform_indices = @transform_4, window_bounds = array<i64: 1, 16>}, {pipeline_mode = #tpu.pipeline_mode<synchronous>, transform_indices = @transform_5, window_bounds = array<i64: 9, 16, 16>}, {pipeline_mode = #tpu.pipeline_mode<synchronous>, transform_indices = @transform_6, window_bounds = array<i64: 1, 16>}, {pipeline_mode = #tpu.pipeline_mode<synchronous>, transform_indices = @transform_7, window_bounds = array<i64: 16, 32>}, {pipeline_mode = #tpu.pipeline_mode<synchronous>, transform_indices = @transform_8, window_bounds = array<i64: 1, 32>}, {transform_indices = @transform_9, window_bounds = array<i64: 64, 32>}]} {
    %c0 = arith.constant 0 : index
    %c0_0 = arith.constant 0 : index
    %0 = vector.load %arg1[%c0, %c0_0] : memref<288x32xbf16, #tpu.memory_space<vmem>>, vector<288x32xbf16>
    %c0_1 = arith.constant 0 : index
    %c0_2 = arith.constant 0 : index
    %1 = vector.load %arg4[%c0_1, %c0_2] : memref<32x16xbf16, #tpu.memory_space<vmem>>, vector<32x16xbf16>
    %cst = arith.constant dense<0.000000e+00> : vector<288x16xf32>
    %2 = tpu.matmul %0, %1, %cst {dimension_numbers = #tpu.dot_dimension_numbers<[1], [0], [0], [1], [0, 0, 1, 1], [], []>} : vector<288x32xbf16>, vector<32x16xbf16>, vector<288x16xf32> -> vector<288x16xf32>
    %c0_3 = arith.constant 0 : index
    %c0_4 = arith.constant 0 : index
    %3 = vector.load %arg5[%c0_3, %c0_4] : memref<1x16xf32, #tpu.memory_space<vmem>>, vector<1x16xf32>
    %4 = vector.broadcast %3 : vector<1x16xf32> to vector<288x16xf32>
    %5 = arith.addf %2, %4 : vector<288x16xf32>
    %cst_5 = arith.constant 0.000000e+00 : f32
    %6 = vector.broadcast %cst_5 : f32 to vector<288x16xf32>
    %7 = arith.maximumf %5, %6 : vector<288x16xf32>
    %c0_6 = arith.constant 0 : index
    %c0_7 = arith.constant 0 : index
    %8 = vector.load %arg3[%c0_6, %c0_7] : memref<288x1xf32, #tpu.memory_space<vmem>>, vector<288x1xf32>
    %9 = vector.broadcast %8 : vector<288x1xf32> to vector<288x16xf32>
    %10 = arith.mulf %7, %9 : vector<288x16xf32>
    %11 = arith.truncf %10 : vector<288x16xf32> to vector<288x16xbf16>
    %c0_8 = arith.constant 0 : index
    %c0_9 = arith.constant 0 : index
    %12 = vector.load %arg7[%c0_8, %c0_9] : memref<1x16xf32, #tpu.memory_space<vmem>>, vector<1x16xf32>
    %13 = vector.shape_cast %12 : vector<1x16xf32> to vector<1x16xf32>
    %14 = vector.broadcast %13 : vector<1x16xf32> to vector<32x16xf32>
    %15 = vector.extract_strided_slice %11 {offsets = [0, 0], sizes = [32, 16], strides = [1, 1]} : vector<288x16xbf16> to vector<32x16xbf16>
    %c0_10 = arith.constant 0 : index
    %c0_11 = arith.constant 0 : index
    %c0_12 = arith.constant 0 : index
    %16 = vector.load %arg6[%c0_10, %c0_11, %c0_12] : memref<9x16x16xbf16, #tpu.memory_space<vmem>>, vector<1x16x16xbf16>
    %17 = vector.shape_cast %16 : vector<1x16x16xbf16> to vector<16x16xbf16>
    %cst_13 = arith.constant dense<0.000000e+00> : vector<32x16xf32>
    %18 = tpu.matmul %15, %17, %cst_13 {dimension_numbers = #tpu.dot_dimension_numbers<[1], [0], [0], [1], [0, 0, 1, 1], [], []>} : vector<32x16xbf16>, vector<16x16xbf16>, vector<32x16xf32> -> vector<32x16xf32>
    %19 = arith.addf %14, %18 : vector<32x16xf32>
    %20 = vector.extract_strided_slice %11 {offsets = [32, 0], sizes = [32, 16], strides = [1, 1]} : vector<288x16xbf16> to vector<32x16xbf16>
    %c1 = arith.constant 1 : index
    %c0_14 = arith.constant 0 : index
    %c0_15 = arith.constant 0 : index
    %21 = vector.load %arg6[%c1, %c0_14, %c0_15] : memref<9x16x16xbf16, #tpu.memory_space<vmem>>, vector<1x16x16xbf16>
    %22 = vector.shape_cast %21 : vector<1x16x16xbf16> to vector<16x16xbf16>
    %cst_16 = arith.constant dense<0.000000e+00> : vector<32x16xf32>
    %23 = tpu.matmul %20, %22, %cst_16 {dimension_numbers = #tpu.dot_dimension_numbers<[1], [0], [0], [1], [0, 0, 1, 1], [], []>} : vector<32x16xbf16>, vector<16x16xbf16>, vector<32x16xf32> -> vector<32x16xf32>
    %24 = arith.addf %19, %23 : vector<32x16xf32>
    %25 = vector.extract_strided_slice %11 {offsets = [64, 0], sizes = [32, 16], strides = [1, 1]} : vector<288x16xbf16> to vector<32x16xbf16>
    %c2 = arith.constant 2 : index
    %c0_17 = arith.constant 0 : index
    %c0_18 = arith.constant 0 : index
    %26 = vector.load %arg6[%c2, %c0_17, %c0_18] : memref<9x16x16xbf16, #tpu.memory_space<vmem>>, vector<1x16x16xbf16>
    %27 = vector.shape_cast %26 : vector<1x16x16xbf16> to vector<16x16xbf16>
    %cst_19 = arith.constant dense<0.000000e+00> : vector<32x16xf32>
    %28 = tpu.matmul %25, %27, %cst_19 {dimension_numbers = #tpu.dot_dimension_numbers<[1], [0], [0], [1], [0, 0, 1, 1], [], []>} : vector<32x16xbf16>, vector<16x16xbf16>, vector<32x16xf32> -> vector<32x16xf32>
    %29 = arith.addf %24, %28 : vector<32x16xf32>
    %30 = vector.extract_strided_slice %11 {offsets = [96, 0], sizes = [32, 16], strides = [1, 1]} : vector<288x16xbf16> to vector<32x16xbf16>
    %c3 = arith.constant 3 : index
    %c0_20 = arith.constant 0 : index
    %c0_21 = arith.constant 0 : index
    %31 = vector.load %arg6[%c3, %c0_20, %c0_21] : memref<9x16x16xbf16, #tpu.memory_space<vmem>>, vector<1x16x16xbf16>
    %32 = vector.shape_cast %31 : vector<1x16x16xbf16> to vector<16x16xbf16>
    %cst_22 = arith.constant dense<0.000000e+00> : vector<32x16xf32>
    %33 = tpu.matmul %30, %32, %cst_22 {dimension_numbers = #tpu.dot_dimension_numbers<[1], [0], [0], [1], [0, 0, 1, 1], [], []>} : vector<32x16xbf16>, vector<16x16xbf16>, vector<32x16xf32> -> vector<32x16xf32>
    %34 = arith.addf %29, %33 : vector<32x16xf32>
    %35 = vector.extract_strided_slice %11 {offsets = [128, 0], sizes = [32, 16], strides = [1, 1]} : vector<288x16xbf16> to vector<32x16xbf16>
    %c4 = arith.constant 4 : index
    %c0_23 = arith.constant 0 : index
    %c0_24 = arith.constant 0 : index
    %36 = vector.load %arg6[%c4, %c0_23, %c0_24] : memref<9x16x16xbf16, #tpu.memory_space<vmem>>, vector<1x16x16xbf16>
    %37 = vector.shape_cast %36 : vector<1x16x16xbf16> to vector<16x16xbf16>
    %cst_25 = arith.constant dense<0.000000e+00> : vector<32x16xf32>
    %38 = tpu.matmul %35, %37, %cst_25 {dimension_numbers = #tpu.dot_dimension_numbers<[1], [0], [0], [1], [0, 0, 1, 1], [], []>} : vector<32x16xbf16>, vector<16x16xbf16>, vector<32x16xf32> -> vector<32x16xf32>
    %39 = arith.addf %34, %38 : vector<32x16xf32>
    %40 = vector.extract_strided_slice %11 {offsets = [160, 0], sizes = [32, 16], strides = [1, 1]} : vector<288x16xbf16> to vector<32x16xbf16>
    %c5 = arith.constant 5 : index
    %c0_26 = arith.constant 0 : index
    %c0_27 = arith.constant 0 : index
    %41 = vector.load %arg6[%c5, %c0_26, %c0_27] : memref<9x16x16xbf16, #tpu.memory_space<vmem>>, vector<1x16x16xbf16>
    %42 = vector.shape_cast %41 : vector<1x16x16xbf16> to vector<16x16xbf16>
    %cst_28 = arith.constant dense<0.000000e+00> : vector<32x16xf32>
    %43 = tpu.matmul %40, %42, %cst_28 {dimension_numbers = #tpu.dot_dimension_numbers<[1], [0], [0], [1], [0, 0, 1, 1], [], []>} : vector<32x16xbf16>, vector<16x16xbf16>, vector<32x16xf32> -> vector<32x16xf32>
    %44 = arith.addf %39, %43 : vector<32x16xf32>
    %45 = vector.extract_strided_slice %11 {offsets = [192, 0], sizes = [32, 16], strides = [1, 1]} : vector<288x16xbf16> to vector<32x16xbf16>
    %c6 = arith.constant 6 : index
    %c0_29 = arith.constant 0 : index
    %c0_30 = arith.constant 0 : index
    %46 = vector.load %arg6[%c6, %c0_29, %c0_30] : memref<9x16x16xbf16, #tpu.memory_space<vmem>>, vector<1x16x16xbf16>
    %47 = vector.shape_cast %46 : vector<1x16x16xbf16> to vector<16x16xbf16>
    %cst_31 = arith.constant dense<0.000000e+00> : vector<32x16xf32>
    %48 = tpu.matmul %45, %47, %cst_31 {dimension_numbers = #tpu.dot_dimension_numbers<[1], [0], [0], [1], [0, 0, 1, 1], [], []>} : vector<32x16xbf16>, vector<16x16xbf16>, vector<32x16xf32> -> vector<32x16xf32>
    %49 = arith.addf %44, %48 : vector<32x16xf32>
    %50 = vector.extract_strided_slice %11 {offsets = [224, 0], sizes = [32, 16], strides = [1, 1]} : vector<288x16xbf16> to vector<32x16xbf16>
    %c7 = arith.constant 7 : index
    %c0_32 = arith.constant 0 : index
    %c0_33 = arith.constant 0 : index
    %51 = vector.load %arg6[%c7, %c0_32, %c0_33] : memref<9x16x16xbf16, #tpu.memory_space<vmem>>, vector<1x16x16xbf16>
    %52 = vector.shape_cast %51 : vector<1x16x16xbf16> to vector<16x16xbf16>
    %cst_34 = arith.constant dense<0.000000e+00> : vector<32x16xf32>
    %53 = tpu.matmul %50, %52, %cst_34 {dimension_numbers = #tpu.dot_dimension_numbers<[1], [0], [0], [1], [0, 0, 1, 1], [], []>} : vector<32x16xbf16>, vector<16x16xbf16>, vector<32x16xf32> -> vector<32x16xf32>
    %54 = arith.addf %49, %53 : vector<32x16xf32>
    %55 = vector.extract_strided_slice %11 {offsets = [256, 0], sizes = [32, 16], strides = [1, 1]} : vector<288x16xbf16> to vector<32x16xbf16>
    %c8 = arith.constant 8 : index
    %c0_35 = arith.constant 0 : index
    %c0_36 = arith.constant 0 : index
    %56 = vector.load %arg6[%c8, %c0_35, %c0_36] : memref<9x16x16xbf16, #tpu.memory_space<vmem>>, vector<1x16x16xbf16>
    %57 = vector.shape_cast %56 : vector<1x16x16xbf16> to vector<16x16xbf16>
    %cst_37 = arith.constant dense<0.000000e+00> : vector<32x16xf32>
    %58 = tpu.matmul %55, %57, %cst_37 {dimension_numbers = #tpu.dot_dimension_numbers<[1], [0], [0], [1], [0, 0, 1, 1], [], []>} : vector<32x16xbf16>, vector<16x16xbf16>, vector<32x16xf32> -> vector<32x16xf32>
    %59 = arith.addf %54, %58 : vector<32x16xf32>
    %cst_38 = arith.constant 0.000000e+00 : f32
    %60 = vector.broadcast %cst_38 : f32 to vector<32x16xf32>
    %61 = arith.maximumf %59, %60 : vector<32x16xf32>
    %62 = arith.truncf %61 : vector<32x16xf32> to vector<32x16xbf16>
    %c0_39 = arith.constant 0 : index
    %c0_40 = arith.constant 0 : index
    %63 = vector.load %arg8[%c0_39, %c0_40] : memref<16x32xbf16, #tpu.memory_space<vmem>>, vector<16x32xbf16>
    %cst_41 = arith.constant dense<0.000000e+00> : vector<32x32xf32>
    %64 = tpu.matmul %62, %63, %cst_41 {dimension_numbers = #tpu.dot_dimension_numbers<[1], [0], [0], [1], [0, 0, 1, 1], [], []>} : vector<32x16xbf16>, vector<16x32xbf16>, vector<32x32xf32> -> vector<32x32xf32>
    %c0_42 = arith.constant 0 : index
    %c0_43 = arith.constant 0 : index
    %65 = vector.load %arg9[%c0_42, %c0_43] : memref<1x32xf32, #tpu.memory_space<vmem>>, vector<1x32xf32>
    %66 = vector.broadcast %65 : vector<1x32xf32> to vector<32x32xf32>
    %67 = arith.addf %64, %66 : vector<32x32xf32>
    %c0_44 = arith.constant 0 : index
    %c0_45 = arith.constant 0 : index
    %68 = vector.load %arg2[%c0_44, %c0_45] : memref<64x32xf32, #tpu.memory_space<vmem>>, vector<32x32xf32>
    %69 = arith.addf %67, %68 : vector<32x32xf32>
    %cst_46 = arith.constant 0.000000e+00 : f32
    %70 = vector.broadcast %cst_46 : f32 to vector<32x32xf32>
    %71 = arith.maximumf %69, %70 : vector<32x32xf32>
    %c0_47 = arith.constant 0 : index
    %c0_48 = arith.constant 0 : index
    %72 = vector.load %arg10[%c0_47, %c0_48] : memref<64x32xf32, #tpu.memory_space<vmem>>, vector<32x32xf32>
    tpu.vector_store %arg10[%c0_47, %c0_48], %71 {strides = array<i32>} : memref<64x32xf32, #tpu.memory_space<vmem>>, vector<32x32xf32>,
    %c32 = arith.constant 32 : index
    %c0_49 = arith.constant 0 : index
    %73 = vector.load %arg2[%c32, %c0_49] : memref<64x32xf32, #tpu.memory_space<vmem>>, vector<32x32xf32>
    %74 = vector.broadcast %65 : vector<1x32xf32> to vector<32x32xf32>
    %75 = arith.addf %74, %73 : vector<32x32xf32>
    %cst_50 = arith.constant 0.000000e+00 : f32
    %76 = vector.broadcast %cst_50 : f32 to vector<32x32xf32>
    %77 = arith.maximumf %75, %76 : vector<32x32xf32>
    %c32_51 = arith.constant 32 : index
    %c0_52 = arith.constant 0 : index
    %78 = vector.load %arg10[%c32_51, %c0_52] : memref<64x32xf32, #tpu.memory_space<vmem>>, vector<32x32xf32>
    tpu.vector_store %arg10[%c32_51, %c0_52], %77 {strides = array<i32>} : memref<64x32xf32, #tpu.memory_space<vmem>>, vector<32x32xf32>,
    return
  }
  func.func @transform_0(%arg0: i32) -> (i32, i32) {
    %c0_i32 = arith.constant 0 : i32
    %c0_i32_0 = arith.constant 0 : i32
    return %arg0, %c0_i32 : i32, i32
  }
  func.func @transform_1(%arg0: i32) -> (i32, i32) {
    %c0_i32 = arith.constant 0 : i32
    %c0_i32_0 = arith.constant 0 : i32
    return %arg0, %c0_i32 : i32, i32
  }
  func.func @transform_2(%arg0: i32) -> (i32, i32) {
    %c0_i32 = arith.constant 0 : i32
    %c0_i32_0 = arith.constant 0 : i32
    %c0_i32_1 = arith.constant 0 : i32
    return %c0_i32, %c0_i32_0 : i32, i32
  }
  func.func @transform_3(%arg0: i32) -> (i32, i32) {
    %c0_i32 = arith.constant 0 : i32
    %c0_i32_0 = arith.constant 0 : i32
    %c0_i32_1 = arith.constant 0 : i32
    return %c0_i32, %c0_i32_0 : i32, i32
  }
  func.func @transform_4(%arg0: i32) -> (i32, i32) {
    %c0_i32 = arith.constant 0 : i32
    %c0_i32_0 = arith.constant 0 : i32
    %c0_i32_1 = arith.constant 0 : i32
    return %c0_i32, %c0_i32_0 : i32, i32
  }
  func.func @transform_5(%arg0: i32) -> (i32, i32, i32) {
    %c0_i32 = arith.constant 0 : i32
    %c0_i32_0 = arith.constant 0 : i32
    %c0_i32_1 = arith.constant 0 : i32
    %c0_i32_2 = arith.constant 0 : i32
    return %c0_i32, %c0_i32_0, %c0_i32_1 : i32, i32, i32
  }
  func.func @transform_6(%arg0: i32) -> (i32, i32) {
    %c0_i32 = arith.constant 0 : i32
    %c0_i32_0 = arith.constant 0 : i32
    %c0_i32_1 = arith.constant 0 : i32
    return %c0_i32, %c0_i32_0 : i32, i32
  }
  func.func @transform_7(%arg0: i32) -> (i32, i32) {
    %c0_i32 = arith.constant 0 : i32
    %c0_i32_0 = arith.constant 0 : i32
    %c0_i32_1 = arith.constant 0 : i32
    return %c0_i32, %c0_i32_0 : i32, i32
  }
  func.func @transform_8(%arg0: i32) -> (i32, i32) {
    %c0_i32 = arith.constant 0 : i32
    %c0_i32_0 = arith.constant 0 : i32
    %c0_i32_1 = arith.constant 0 : i32
    return %c0_i32, %c0_i32_0 : i32, i32
  }
  func.func @transform_9(%arg0: i32) -> (i32, i32) {
    %c0_i32 = arith.constant 0 : i32
    %c0_i32_0 = arith.constant 0 : i32
    return %arg0, %c0_i32 : i32, i32
  }
}

</mosaic_0001>

<llo_original>
// kernel: forward.1
$region0: #{forward.1}
  #allocation0 [shape = 'u32[]', space=smem, size = 0x4, offset = 0x4, fixed_abs, tag = 'smem constant byte address 0x4 - core index']
  #allocation1 [shape = 'u32[144,128]{1,0:T(1,128)}', space=vmem, size = 0x12000, scoped, tag = 'internal scratch']
  %s0 = inlined_call_operand.vmem [shape: bf16[576,32], index: 0, kind: input, shape index: {}]
  %s1 = inlined_call_operand.vmem [shape: f32[128,32], index: 1, kind: input, shape index: {}]
  %s2 = inlined_call_operand.vmem [shape: f32[288,1], index: 2, kind: input, shape index: {}]
  %s3 = inlined_call_operand.vmem [shape: bf16[32,16], index: 3, kind: input, shape index: {}]
  %s4 = inlined_call_operand.vmem [shape: f32[1,16], index: 4, kind: input, shape index: {}]
  %s5 = inlined_call_operand.vmem [shape: bf16[9,16,16], index: 5, kind: input, shape index: {}]
  %s6 = inlined_call_operand.vmem [shape: f32[1,16], index: 6, kind: input, shape index: {}]
  %s7 = inlined_call_operand.vmem [shape: bf16[16,32], index: 7, kind: input, shape index: {}]
  %s8 = inlined_call_operand.vmem [shape: f32[1,32], index: 8, kind: input, shape index: {}]
  %s9 = inlined_call_operand.vmem [shape: f32[128,32], index: 9, kind: output, shape index: {}]
  %s10 = sld [smem:[#allocation0]]
  $region69: #{forward.1} parent=0
    _
  %s12 = ssub.s32 1, %s10
  %s13 = scalar_select 0, %s12, %s10
  loop: start=0, step=1, limit=4
  $region2: #{forward.1} parent=0 // loop_pre_header
    _
  $region3: #{forward.1} parent=0 // loop_header
    %s15 = sphi 0, %s19
    %p16 = scmp.ge.s32.totalorder %s15, 4
    %s25 = sphi 0, %s27
    %s28 = sphi 0, %s25
    %s29 = sphi 0, %s28
    %s45 = sphi 0, %s29
    %s51 = sphi 0, %s53
    %s54 = sphi 0, %s51
    %s55 = sphi 0, %s54
    %s71 = sphi 0, %s55
    %s75 = sphi 0, %s75
    %s77 = sphi 0, %s75
    %s78 = sphi 0, %s77
    %s92 = sphi 0, %s78
    %s96 = sphi 0, %s96
    %s98 = sphi 0, %s96
    %s99 = sphi 0, %s98
    %s113 = sphi 0, %s99
    %s117 = sphi 0, %s117
    %s119 = sphi 0, %s117
    %s120 = sphi 0, %s119
    %s134 = sphi 0, %s120
    %s138 = sphi 0, %s138
    %s140 = sphi 0, %s138
    %s141 = sphi 0, %s140
    %s155 = sphi 0, %s141
    %s159 = sphi 0, %s159
    %s161 = sphi 0, %s159
    %s162 = sphi 0, %s161
    %s176 = sphi 0, %s162
    %s180 = sphi 0, %s180
    %s182 = sphi 0, %s180
    %s183 = sphi 0, %s182
    %s197 = sphi 0, %s183
    %s201 = sphi 0, %s201
    %s203 = sphi 0, %s201
    %s204 = sphi 0, %s203
    %s218 = sphi 0, %s204
    %s224 = sphi 0, %s226
    %s227 = sphi 0, %s224
    %s228 = sphi 0, %s227
    %s244 = sphi 0, %s228
  $region4: #{forward.1} parent=0 // loop_header_branch
    %18 = sbr.rel (%p16) target = $region8
  $region5: #{forward.1} parent=0 // loop_body
    %s20 = ssub.s32 %s15, 1
    %s21 = ssub.s32 %s15, 2
    %s22 = sadd.s32 %s15, 1
    %s23 = ssub.s32 %s15, %s22
    %p24 = scmp.eq.s32.totalorder %s23, 0
    %s26 = sadd.s32 %s25, 1
    %s27 = scalar_select %p24, %s25, %s26
    %p30 = pneg %p24
    %p31 = scmp.eq.s32.totalorder %s15, 1
    %p32 = por %p30, %p31
    %p33 = scmp.ne.s32.totalorder %s25, %s28
    %p34 = scmp.eq.s32.totalorder %s15, 0
    %p35 = por %p33, %p34
    %p36 = scmp.ne.s32.totalorder %s25, %s28
    %p37 = scmp.eq.s32.totalorder %s20, 1
    %p38 = por %p36, %p37
    %p39 = scmp.ne.s32.totalorder %s28, %s29
    %p40 = scmp.eq.s32.totalorder %s20, 0
    %p41 = por %p39, %p40
    %p42 = scmp.ne.s32.totalorder %s28, %s29
    %p43 = scmp.eq.s32.totalorder %s21, 1
    %p44 = por %p42, %p43
    %p46 = scmp.ne.s32.totalorder %s29, %s45
    %p47 = scmp.eq.s32.totalorder %s21, 0
    %p48 = por %p46, %p47
    %s49 = ssub.s32 %s15, %s22
    %p50 = scmp.eq.s32.totalorder %s49, 0
    %s52 = sadd.s32 %s51, 1
    %s53 = scalar_select %p50, %s51, %s52
    %p56 = pneg %p50
    %p57 = scmp.eq.s32.totalorder %s15, 1
    %p58 = por %p56, %p57
    %p59 = scmp.ne.s32.totalorder %s51, %s54
    %p60 = scmp.eq.s32.totalorder %s15, 0
    %p61 = por %p59, %p60
    %p62 = scmp.ne.s32.totalorder %s51, %s54
    %p63 = scmp.eq.s32.totalorder %s20, 1
    %p64 = por %p62, %p63
    %p65 = scmp.ne.s32.totalorder %s54, %s55
    %p66 = scmp.eq.s32.totalorder %s20, 0
    %p67 = por %p65, %p66
    %p68 = scmp.ne.s32.totalorder %s54, %s55
    %p69 = scmp.eq.s32.totalorder %s21, 1
    %p70 = por %p68, %p69
    %p72 = scmp.ne.s32.totalorder %s55, %s71
    %p73 = scmp.eq.s32.totalorder %s21, 0
    %p74 = por %p72, %p73
    %s76 = sadd.s32 %s75, 1
    %p79 = scmp.eq.s32.totalorder %s15, 1
    %p80 = scmp.ne.s32.totalorder %s75, %s77
    %p81 = scmp.eq.s32.totalorder %s15, 0
    %p82 = por %p80, %p81
    %p83 = scmp.ne.s32.totalorder %s75, %s77
    %p84 = scmp.eq.s32.totalorder %s20, 1
    %p85 = por %p83, %p84
    %p86 = scmp.ne.s32.totalorder %s77, %s78
    %p87 = scmp.eq.s32.totalorder %s20, 0
    %p88 = por %p86, %p87
    %p89 = scmp.ne.s32.totalorder %s77, %s78
    %p90 = scmp.eq.s32.totalorder %s21, 1
    %p91 = por %p89, %p90
    %p93 = scmp.ne.s32.totalorder %s78, %s92
    %p94 = scmp.eq.s32.totalorder %s21, 0
    %p95 = por %p93, %p94
    %s97 = sadd.s32 %s96, 1
    %p100 = scmp.eq.s32.totalorder %s15, 1
    %p101 = scmp.ne.s32.totalorder %s96, %s98
    %p102 = scmp.eq.s32.totalorder %s15, 0
    %p103 = por %p101, %p102
    %p104 = scmp.ne.s32.totalorder %s96, %s98
    %p105 = scmp.eq.s32.totalorder %s20, 1
    %p106 = por %p104, %p105
    %p107 = scmp.ne.s32.totalorder %s98, %s99
    %p108 = scmp.eq.s32.totalorder %s20, 0
    %p109 = por %p107, %p108
    %p110 = scmp.ne.s32.totalorder %s98, %s99
    %p111 = scmp.eq.s32.totalorder %s21, 1
    %p112 = por %p110, %p111
    %p114 = scmp.ne.s32.totalorder %s99, %s113
    %p115 = scmp.eq.s32.totalorder %s21, 0
    %p116 = por %p114, %p115
    %s118 = sadd.s32 %s117, 1
    %p121 = scmp.eq.s32.totalorder %s15, 1
    %p122 = scmp.ne.s32.totalorder %s117, %s119
    %p123 = scmp.eq.s32.totalorder %s15, 0
    %p124 = por %p122, %p123
    %p125 = scmp.ne.s32.totalorder %s117, %s119
    %p126 = scmp.eq.s32.totalorder %s20, 1
    %p127 = por %p125, %p126
    %p128 = scmp.ne.s32.totalorder %s119, %s120
    %p129 = scmp.eq.s32.totalorder %s20, 0
    %p130 = por %p128, %p129
    %p131 = scmp.ne.s32.totalorder %s119, %s120
    %p132 = scmp.eq.s32.totalorder %s21, 1
    %p133 = por %p131, %p132
    %p135 = scmp.ne.s32.totalorder %s120, %s134
    %p136 = scmp.eq.s32.totalorder %s21, 0
    %p137 = por %p135, %p136
    %s139 = sadd.s32 %s138, 1
    %p142 = scmp.eq.s32.totalorder %s15, 1
    %p143 = scmp.ne.s32.totalorder %s138, %s140
    %p144 = scmp.eq.s32.totalorder %s15, 0
    %p145 = por %p143, %p144
    %p146 = scmp.ne.s32.totalorder %s138, %s140
    %p147 = scmp.eq.s32.totalorder %s20, 1
    %p148 = por %p146, %p147
    %p149 = scmp.ne.s32.totalorder %s140, %s141
    %p150 = scmp.eq.s32.totalorder %s20, 0
    %p151 = por %p149, %p150
    %p152 = scmp.ne.s32.totalorder %s140, %s141
    %p153 = scmp.eq.s32.totalorder %s21, 1
    %p154 = por %p152, %p153
    %p156 = scmp.ne.s32.totalorder %s141, %s155
    %p157 = scmp.eq.s32.totalorder %s21, 0
    %p158 = por %p156, %p157
    %s160 = sadd.s32 %s159, 1
    %p163 = scmp.eq.s32.totalorder %s15, 1
    %p164 = scmp.ne.s32.totalorder %s159, %s161
    %p165 = scmp.eq.s32.totalorder %s15, 0
    %p166 = por %p164, %p165
    %p167 = scmp.ne.s32.totalorder %s159, %s161
    %p168 = scmp.eq.s32.totalorder %s20, 1
    %p169 = por %p167, %p168
    %p170 = scmp.ne.s32.totalorder %s161, %s162
    %p171 = scmp.eq.s32.totalorder %s20, 0
    %p172 = por %p170, %p171
    %p173 = scmp.ne.s32.totalorder %s161, %s162
    %p174 = scmp.eq.s32.totalorder %s21, 1
    %p175 = por %p173, %p174
    %p177 = scmp.ne.s32.totalorder %s162, %s176
    %p178 = scmp.eq.s32.totalorder %s21, 0
    %p179 = por %p177, %p178
    %s181 = sadd.s32 %s180, 1
    %p184 = scmp.eq.s32.totalorder %s15, 1
    %p185 = scmp.ne.s32.totalorder %s180, %s182
    %p186 = scmp.eq.s32.totalorder %s15, 0
    %p187 = por %p185, %p186
    %p188 = scmp.ne.s32.totalorder %s180, %s182
    %p189 = scmp.eq.s32.totalorder %s20, 1
    %p190 = por %p188, %p189
    %p191 = scmp.ne.s32.totalorder %s182, %s183
    %p192 = scmp.eq.s32.totalorder %s20, 0
    %p193 = por %p191, %p192
    %p194 = scmp.ne.s32.totalorder %s182, %s183
    %p195 = scmp.eq.s32.totalorder %s21, 1
    %p196 = por %p194, %p195
    %p198 = scmp.ne.s32.totalorder %s183, %s197
    %p199 = scmp.eq.s32.totalorder %s21, 0
    %p200 = por %p198, %p199
    %s202 = sadd.s32 %s201, 1
    %p205 = scmp.eq.s32.totalorder %s15, 1
    %p206 = scmp.ne.s32.totalorder %s201, %s203
    %p207 = scmp.eq.s32.totalorder %s15, 0
    %p208 = por %p206, %p207
    %p209 = scmp.ne.s32.totalorder %s201, %s203
    %p210 = scmp.eq.s32.totalorder %s20, 1
    %p211 = por %p209, %p210
    %p212 = scmp.ne.s32.totalorder %s203, %s204
    %p213 = scmp.eq.s32.totalorder %s20, 0
    %p214 = por %p212, %p213
    %p215 = scmp.ne.s32.totalorder %s203, %s204
    %p216 = scmp.eq.s32.totalorder %s21, 1
    %p217 = por %p215, %p216
    %p219 = scmp.ne.s32.totalorder %s204, %s218
    %p220 = scmp.eq.s32.totalorder %s21, 0
    %p221 = por %p219, %p220
    %s222 = ssub.s32 %s15, %s22
    %p223 = scmp.eq.s32.totalorder %s222, 0
    %s225 = sadd.s32 %s224, 1
    %s226 = scalar_select %p223, %s224, %s225
    %p229 = pneg %p223
    %p230 = scmp.eq.s32.totalorder %s15, 1
    %p231 = por %p229, %p230
    %p232 = scmp.ne.s32.totalorder %s224, %s227
    %p233 = scmp.eq.s32.totalorder %s15, 0
    %p234 = por %p232, %p233
    %p235 = scmp.ne.s32.totalorder %s224, %s227
    %p236 = scmp.eq.s32.totalorder %s20, 1
    %p237 = por %p235, %p236
    %p238 = scmp.ne.s32.totalorder %s227, %s228
    %p239 = scmp.eq.s32.totalorder %s20, 0
    %p240 = por %p238, %p239
    %p241 = scmp.ne.s32.totalorder %s227, %s228
    %p242 = scmp.eq.s32.totalorder %s21, 1
    %p243 = por %p241, %p242
    %p245 = scmp.ne.s32.totalorder %s228, %s244
    %p246 = scmp.eq.s32.totalorder %s21, 0
    %p247 = por %p245, %p246
    %p248 = scmp.le.s32.totalorder 1, %s15
    %p249 = scmp.lt.s32.totalorder %s15, 3
    %p250 = pnand %p248, %p249
    %p251 = pneg %p250
    // Predicated region
    $region9: #{forward.1} parent=5 // pred_check
      _
    $region10: #{forward.1} parent=5 // pred_check_branch
      %253 = sbr.rel (%p250) target = $region12
    $region11: #{forward.1} parent=5 // pred_region
      %s254 = ssub.s32 %s15, 1
      // Predicated region
      $region13: #{forward.1} parent=11 // pred_check
        %p255 = pneg %p88
      $region14: #{forward.1} parent=11 // pred_check_branch
        %257 = sbr.rel (%p255) target = $region16
      $region15: #{forward.1} parent=11 // pred_region
        _
      $region16: #{forward.1} parent=11 // pred_fallthru
        _
      // Predicated region
      $region17: #{forward.1} parent=11 // pred_check
        %p258 = pneg %p109
      $region18: #{forward.1} parent=11 // pred_check_branch
        %260 = sbr.rel (%p258) target = $region20
      $region19: #{forward.1} parent=11 // pred_region
        _
      $region20: #{forward.1} parent=11 // pred_fallthru
        _
      // Predicated region
      $region21: #{forward.1} parent=11 // pred_check
        %p261 = pneg %p130
      $region22: #{forward.1} parent=11 // pred_check_branch
        %263 = sbr.rel (%p261) target = $region24
      $region23: #{forward.1} parent=11 // pred_region
        _
      $region24: #{forward.1} parent=11 // pred_fallthru
        _
      // Predicated region
      $region25: #{forward.1} parent=11 // pred_check
        %p264 = pneg %p151
      $region26: #{forward.1} parent=11 // pred_check_branch
        %266 = sbr.rel (%p264) target = $region28
      $region27: #{forward.1} parent=11 // pred_region
        _
      $region28: #{forward.1} parent=11 // pred_fallthru
        _
      // Predicated region
      $region29: #{forward.1} parent=11 // pred_check
        %p267 = pneg %p172
      $region30: #{forward.1} parent=11 // pred_check_branch
        %269 = sbr.rel (%p267) target = $region32
      $region31: #{forward.1} parent=11 // pred_region
        _
      $region32: #{forward.1} parent=11 // pred_fallthru
        _
      // Predicated region
      $region33: #{forward.1} parent=11 // pred_check
        %p270 = pneg %p193
      $region34: #{forward.1} parent=11 // pred_check_branch
        %272 = sbr.rel (%p270) target = $region36
      $region35: #{forward.1} parent=11 // pred_region
        _
      $region36: #{forward.1} parent=11 // pred_fallthru
        _
      // Predicated region
      $region37: #{forward.1} parent=11 // pred_check
        %p273 = pneg %p214
      $region38: #{forward.1} parent=11 // pred_check_branch
        %275 = sbr.rel (%p273) target = $region40
      $region39: #{forward.1} parent=11 // pred_region
        _
      $region40: #{forward.1} parent=11 // pred_fallthru
        _
    $region12: #{forward.1} parent=5 // pred_fallthru
      _
    %p276 = scmp.lt.s32.totalorder %s15, 2
    // Predicated region
    $region41: #{forward.1} parent=5 // pred_check
      %p277 = pneg %p276
    $region42: #{forward.1} parent=5 // pred_check_branch
      %279 = sbr.rel (%p277) target = $region44
    $region43: #{forward.1} parent=5 // pred_region
      // Predicated region
      $region45: #{forward.1} parent=43 // pred_check
        %p280 = pneg %p35
      $region46: #{forward.1} parent=43 // pred_check_branch
        %282 = sbr.rel (%p280) target = $region48
      $region47: #{forward.1} parent=43 // pred_region
        %s283 = smul.u32 36, %s15
        %p284 = scmp.lt.s32.totalorder %s283, 71
        %s285 = scalar_select %p284, %s283, 71
        %s286 = smul.addr %s285, 4
        %s287 = scalar_lea.vmem %s0, %s286
        %s288 = smul.u32 36, %s15
      $region48: #{forward.1} parent=43 // pred_fallthru
        _
      // Predicated region
      $region49: #{forward.1} parent=43 // pred_check
        %p289 = pneg %p61
      $region50: #{forward.1} parent=43 // pred_check_branch
        %291 = sbr.rel (%p289) target = $region52
      $region51: #{forward.1} parent=43 // pred_region
        %s292 = smul.u32 8, %s15
        %p293 = scmp.lt.s32.totalorder %s292, 15
        %s294 = scalar_select %p293, %s292, 15
        %s295 = smul.addr %s294, 8
        %s296 = scalar_lea.vmem %s1, %s295
        %s297 = smul.u32 8, %s15
      $region52: #{forward.1} parent=43 // pred_fallthru
        _
    $region44: #{forward.1} parent=5 // pred_fallthru
      _
    %p298 = scmp.le.s32.totalorder 1, %s15
    %p299 = scmp.lt.s32.totalorder %s15, 3
    %p300 = pnand %p298, %p299
    %p301 = pneg %p300
    // Predicated region
    $region53: #{forward.1} parent=5 // pred_check
      _
    $region54: #{forward.1} parent=5 // pred_check_branch
      %303 = sbr.rel (%p300) target = $region56
    $region55: #{forward.1} parent=5 // pred_region
      %s304 = ssub.s32 %s15, 1
      %s305 = smul.u32 36, %s20
      %p306 = scmp.lt.s32.totalorder %s305, 71
      %s307 = scalar_select %p306, %s305, 71
      %s308 = smul.addr %s307, 4
      %s309 = scalar_lea.vmem %s0, %s308
      %p310 = pneg %p41
      %p311 = pneg %p38
      %s312 = smul.u32 8, %s20
      %p313 = scmp.lt.s32.totalorder %s312, 15
      %s314 = scalar_select %p313, %s312, 15
      %s315 = smul.addr %s314, 8
      %s316 = scalar_lea.vmem %s1, %s315
      %p317 = pneg %p67
      %p318 = pneg %p64
      %p319 = pneg %p88
      %p320 = pneg %p85
      %p321 = pneg %p109
      %p322 = pneg %p106
      %p323 = pneg %p130
      %p324 = pneg %p127
      %p325 = pneg %p151
      %p326 = pneg %p148
      %p327 = pneg %p172
      %p328 = pneg %p169
      %p329 = pneg %p193
      %p330 = pneg %p190
      %p331 = pneg %p214
      %p332 = pneg %p211
      %p333 = pneg %p240
      %p334 = pneg %p237
      %s335 = smul.u32 8, %s20
      %p336 = scmp.lt.s32.totalorder %s335, 15
      %s337 = scalar_select %p336, %s335, 15
      %s338 = smul.addr %s337, 8
      %s339 = scalar_lea.vmem %s9, %s338
      %s340 = smul.u32 36, %s20
      %p341 = scmp.lt.s32.totalorder %s340, 71
      %s342 = scalar_select %p341, %s340, 71
      %s343 = smul.addr %s342, 4
      %s344 = scalar_lea.vmem %s0, %s343
      %s345 = smul.u32 36, %s20
      %s346 = smul.u32 8, %s20
      %p347 = scmp.lt.s32.totalorder %s346, 15
      %s348 = scalar_select %p347, %s346, 15
      %s349 = smul.addr %s348, 8
      %s350 = scalar_lea.vmem %s1, %s349
      %s351 = smul.u32 8, %s20
      %s352 = smul.u32 8, %s20
      %p353 = scmp.lt.s32.totalorder %s352, 15
      %s354 = scalar_select %p353, %s352, 15
      %s355 = smul.addr %s354, 8
      %s356 = scalar_lea.vmem %s9, %s355
      %s357 = smul.u32 8, %s20
      %v359 = vld [vmem:[%s344] sm:$0xf]
      %v360 = vld [vmem:[%s344 + $0x4] sm:$0xf]
      %v361 = vld [vmem:[%s344 + $0x8] sm:$0xf]
      %v362 = vld [vmem:[%s344 + $0xc] sm:$0xf]
      %v363 = vld [vmem:[%s344 + $0x10] sm:$0xf]
      %v364 = vld [vmem:[%s344 + $0x14] sm:$0xf]
      %v365 = vld [vmem:[%s344 + $0x18] sm:$0xf]
      %v366 = vld [vmem:[%s344 + $0x1c] sm:$0xf]
      %v367 = vld [vmem:[%s344 + $0x20] sm:$0xf]
      %v368 = vld [vmem:[%s344 + $0x24] sm:$0xf]
      %v369 = vld [vmem:[%s344 + $0x28] sm:$0xf]
      %v370 = vld [vmem:[%s344 + $0x2c] sm:$0xf]
      %v371 = vld [vmem:[%s344 + $0x30] sm:$0xf]
      %v372 = vld [vmem:[%s344 + $0x34] sm:$0xf]
      %v373 = vld [vmem:[%s344 + $0x38] sm:$0xf]
      %v374 = vld [vmem:[%s344 + $0x3c] sm:$0xf]
      %v375 = vld [vmem:[%s344 + $0x40] sm:$0xf]
      %v376 = vld [vmem:[%s344 + $0x44] sm:$0xf]
      %v377 = vld [vmem:[%s344 + $0x48] sm:$0xf]
      %v378 = vld [vmem:[%s344 + $0x4c] sm:$0xf]
      %v379 = vld [vmem:[%s344 + $0x50] sm:$0xf]
      %v380 = vld [vmem:[%s344 + $0x54] sm:$0xf]
      %v381 = vld [vmem:[%s344 + $0x58] sm:$0xf]
      %v382 = vld [vmem:[%s344 + $0x5c] sm:$0xf]
      %v383 = vld [vmem:[%s344 + $0x60] sm:$0xf]
      %v384 = vld [vmem:[%s344 + $0x64] sm:$0xf]
      %v385 = vld [vmem:[%s344 + $0x68] sm:$0xf]
      %v386 = vld [vmem:[%s344 + $0x6c] sm:$0xf]
      %v387 = vld [vmem:[%s344 + $0x70] sm:$0xf]
      %v388 = vld [vmem:[%s344 + $0x74] sm:$0xf]
      %v389 = vld [vmem:[%s344 + $0x78] sm:$0xf]
      %v390 = vld [vmem:[%s344 + $0x7c] sm:$0xf]
      %v391 = vld [vmem:[%s344 + $0x80] sm:$0xf]
      %v392 = vld [vmem:[%s344 + $0x84] sm:$0xf]
      %v393 = vld [vmem:[%s344 + $0x88] sm:$0xf]
      %v394 = vld [vmem:[%s344 + $0x8c] sm:$0xf]
      %v395 = vld [vmem:[%s3] sm:$0xf]
      %v396 = vld [vmem:[%s3 + $0x4] sm:$0xf]
      %v397 = vld [vmem:[%s3 + $0x8] sm:$0xf]
      %v398 = vld [vmem:[%s3 + $0xc] sm:$0xf]
      %v399 = vld [vmem:[%s4] sm:$0x1]
      %v401 = vlaneseq
      %v402 = vshrl.u32 %v401, 7
      %v403 = vsub.s32 0, %v402
      %v404 = vrot.slane %v399, %v403
      %v442 = vunpack.c.l.b16 %v359
      %v443 = vunpack.c.l.b16 %v360
      %v444 = vunpack.c.l.b16 %v361
      %v445 = vunpack.c.l.b16 %v362
      %v446 = vunpack.c.l.b16 %v363
      %v447 = vunpack.c.l.b16 %v364
      %v448 = vunpack.c.l.b16 %v365
      %v449 = vunpack.c.l.b16 %v366
      %v450 = vunpack.c.l.b16 %v367
      %v451 = vunpack.c.l.b16 %v368
      %v452 = vunpack.c.l.b16 %v369
      %v453 = vunpack.c.l.b16 %v370
      %v454 = vunpack.c.l.b16 %v371
      %v455 = vunpack.c.l.b16 %v372
      %v456 = vunpack.c.l.b16 %v373
      %v457 = vunpack.c.l.b16 %v374
      %v458 = vunpack.c.l.b16 %v375
      %v459 = vunpack.c.l.b16 %v376
      %v460 = vunpack.c.l.b16 %v377
      %v461 = vunpack.c.l.b16 %v378
      %v462 = vunpack.c.l.b16 %v379
      %v463 = vunpack.c.l.b16 %v380
      %v464 = vunpack.c.l.b16 %v381
      %v465 = vunpack.c.l.b16 %v382
      %v466 = vunpack.c.l.b16 %v383
      %v467 = vunpack.c.l.b16 %v384
      %v468 = vunpack.c.l.b16 %v385
      %v469 = vunpack.c.l.b16 %v386
      %v470 = vunpack.c.l.b16 %v387
      %v471 = vunpack.c.l.b16 %v388
      %v472 = vunpack.c.l.b16 %v389
      %v473 = vunpack.c.l.b16 %v390
      %v474 = vunpack.c.l.b16 %v391
      %v475 = vunpack.c.l.b16 %v392
      %v476 = vunpack.c.l.b16 %v393
      %v477 = vunpack.c.l.b16 %v394
      %v478 = vpack.c.b16 %v443, %v442
      %v479 = vpack.c.b16 %v445, %v444
      %v480 = vpack.c.b16 %v447, %v446
      %v481 = vpack.c.b16 %v449, %v448
      %v482 = vpack.c.b16 %v451, %v450
      %v483 = vpack.c.b16 %v453, %v452
      %v484 = vpack.c.b16 %v455, %v454
      %v485 = vpack.c.b16 %v457, %v456
      %v486 = vpack.c.b16 %v459, %v458
      %v487 = vpack.c.b16 %v461, %v460
      %v488 = vpack.c.b16 %v463, %v462
      %v489 = vpack.c.b16 %v465, %v464
      %v490 = vpack.c.b16 %v467, %v466
      %v491 = vpack.c.b16 %v469, %v468
      %v492 = vpack.c.b16 %v471, %v470
      %v493 = vpack.c.b16 %v473, %v472
      %v494 = vpack.c.b16 %v475, %v474
      %v495 = vpack.c.b16 %v477, %v476
      %v500 = vunpack.c.l.b16 %v395
      %v501 = vunpack.c.l.b16 %v396
      %v502 = vunpack.c.l.b16 %v397
      %v503 = vunpack.c.l.b16 %v398
      %v504 = vpack.c.b16 %v501, %v500
      %v505 = vpack.c.b16 %v503, %v502
      %vm508 = vcmask 261120
      %v510 = vsel %vm508, %v478, 0
      %v513 = vsel %vm508, %v479, 0
      %v516 = vsel %vm508, %v480, 0
      %v519 = vsel %vm508, %v481, 0
      %v522 = vsel %vm508, %v482, 0
      %v525 = vsel %vm508, %v483, 0
      %v528 = vsel %vm508, %v484, 0
      %v531 = vsel %vm508, %v485, 0
      %v534 = vsel %vm508, %v486, 0
      %v537 = vsel %vm508, %v487, 0
      %v540 = vsel %vm508, %v488, 0
      %v543 = vsel %vm508, %v489, 0
      %v546 = vsel %vm508, %v490, 0
      %v549 = vsel %vm508, %v491, 0
      %v552 = vsel %vm508, %v492, 0
      %v555 = vsel %vm508, %v493, 0
      %v558 = vsel %vm508, %v494, 0
      %v561 = vsel %vm508, %v495, 0
      %563 = vmatprep.subr.bf16.mxu0 0
      %564 = vmatpush1.bf16.msra.mxu0 0
      %565 = vmatprep.subr.bf16.mxu0 0
      %566 = vmatpush1.bf16.msra.mxu0 0
      %567 = vmatprep.subr.bf16.mxu0 0
      %568 = vmatpush1.bf16.msra.mxu0 0
      %569 = vmatprep.subr.bf16.mxu0 0
      %570 = vmatpush1.bf16.msra.mxu0 0
      %571 = vmatprep.subr.bf16.mxu0 0
      %572 = vmatpush1.bf16.msra.mxu0 0
      %573 = vmatprep.subr.bf16.mxu0 0
      %574 = vmatpush1.bf16.msra.mxu0 0
      %575 = vmatprep.subr.bf16.mxu0 0
      %576 = vmatpush1.bf16.msra.mxu0 %v505
      %577 = vmatprep.subr.bf16.mxu0 0
      %578 = vmatpush1.bf16.msra.mxu0 %v504
      %579 = vmatprep.subr.bf16.mxu0 0
      %580 = vmatpush2.bf16.msra.mxu0 0
      %581 = vmatprep.subr.bf16.mxu0 0
      %582 = vmatpush2.bf16.msra.mxu0 0
      %583 = vmatprep.subr.bf16.mxu0 0
      %584 = vmatpush2.bf16.msra.mxu0 0
      %585 = vmatprep.subr.bf16.mxu0 0
      %586 = vmatpush2.bf16.msra.mxu0 0
      %587 = vmatprep.subr.bf16.mxu0 0
      %588 = vmatpush2.bf16.msra.mxu0 0
      %589 = vmatprep.subr.bf16.mxu0 0
      %590 = vmatpush2.bf16.msra.mxu0 0
      %591 = vmatprep.subr.bf16.mxu0 0
      %592 = vmatpush2.bf16.msra.mxu0 0
      %593 = vmatprep.subr.bf16.mxu0 0
      %594 = vmatpush2.bf16.msra.mxu0 0
      %595 = vmatprep.mubr.bf16.mxu0 0
      %596 = vmatmul.mubr.bf16.gmra.mxu0 %v510
      %v597 = vpop.f32.mrf.mxu0
      %v598 = vadd.f32 %v404, %v597
      %v599 = vpop.f32.mrf.mxu0
      %v600 = vpop.f32.mrf.mxu0
      %v601 = vadd.f32 %v404, %v600
      %v602 = vpop.f32.mrf.mxu0
      %603 = vmatprep.mubr.bf16.mxu0 0
      %604 = vmatmul.mubr.bf16.gmra.mxu0 %v513
      %v605 = vpop.f32.mrf.mxu0
      %v606 = vadd.f32 %v404, %v605
      %v607 = vpop.f32.mrf.mxu0
      %v608 = vpop.f32.mrf.mxu0
      %v609 = vadd.f32 %v404, %v608
      %v610 = vpop.f32.mrf.mxu0
      %611 = vmatprep.mubr.bf16.mxu0 0
      %612 = vmatmul.mubr.bf16.gmra.mxu0 %v516
      %v613 = vpop.f32.mrf.mxu0
      %v614 = vadd.f32 %v404, %v613
      %v615 = vpop.f32.mrf.mxu0
      %v616 = vpop.f32.mrf.mxu0
      %v617 = vadd.f32 %v404, %v616
      %v618 = vpop.f32.mrf.mxu0
      %619 = vmatprep.mubr.bf16.mxu0 0
      %620 = vmatmul.mubr.bf16.gmra.mxu0 %v519
      %v621 = vpop.f32.mrf.mxu0
      %v622 = vadd.f32 %v404, %v621
      %v623 = vpop.f32.mrf.mxu0
      %v624 = vpop.f32.mrf.mxu0
      %v625 = vadd.f32 %v404, %v624
      %v626 = vpop.f32.mrf.mxu0
      %627 = vmatprep.mubr.bf16.mxu0 0
      %628 = vmatmul.mubr.bf16.gmra.mxu0 %v522
      %v629 = vpop.f32.mrf.mxu0
      %v630 = vadd.f32 %v404, %v629
      %v631 = vpop.f32.mrf.mxu0
      %v632 = vpop.f32.mrf.mxu0
      %v633 = vadd.f32 %v404, %v632
      %v634 = vpop.f32.mrf.mxu0
      %635 = vmatprep.mubr.bf16.mxu0 0
      %636 = vmatmul.mubr.bf16.gmra.mxu0 %v525
      %v637 = vpop.f32.mrf.mxu0
      %v638 = vadd.f32 %v404, %v637
      %v639 = vpop.f32.mrf.mxu0
      %v640 = vpop.f32.mrf.mxu0
      %v641 = vadd.f32 %v404, %v640
      %v642 = vpop.f32.mrf.mxu0
      %643 = vmatprep.mubr.bf16.mxu0 0
      %644 = vmatmul.mubr.bf16.gmra.mxu0 %v528
      %v645 = vpop.f32.mrf.mxu0
      %v646 = vadd.f32 %v404, %v645
      %v647 = vpop.f32.mrf.mxu0
      %v648 = vpop.f32.mrf.mxu0
      %v649 = vadd.f32 %v404, %v648
      %v650 = vpop.f32.mrf.mxu0
      %651 = vmatprep.mubr.bf16.mxu0 0
      %652 = vmatmul.mubr.bf16.gmra.mxu0 %v531
      %v653 = vpop.f32.mrf.mxu0
      %v654 = vadd.f32 %v404, %v653
      %v655 = vpop.f32.mrf.mxu0
      %v656 = vpop.f32.mrf.mxu0
      %v657 = vadd.f32 %v404, %v656
      %v658 = vpop.f32.mrf.mxu0
      %659 = vmatprep.mubr.bf16.mxu0 0
      %660 = vmatmul.mubr.bf16.gmra.mxu0 %v534
      %v661 = vpop.f32.mrf.mxu0
      %v662 = vadd.f32 %v404, %v661
      %v663 = vpop.f32.mrf.mxu0
      %v664 = vpop.f32.mrf.mxu0
      %v665 = vadd.f32 %v404, %v664
      %v666 = vpop.f32.mrf.mxu0
      %667 = vmatprep.mubr.bf16.mxu0 0
      %668 = vmatmul.mubr.bf16.gmra.mxu0 %v537
      %v669 = vpop.f32.mrf.mxu0
      %v670 = vadd.f32 %v404, %v669
      %v671 = vpop.f32.mrf.mxu0
      %v672 = vpop.f32.mrf.mxu0
      %v673 = vadd.f32 %v404, %v672
      %v674 = vpop.f32.mrf.mxu0
      %675 = vmatprep.mubr.bf16.mxu0 0
      %676 = vmatmul.mubr.bf16.gmra.mxu0 %v540
      %v677 = vpop.f32.mrf.mxu0
      %v678 = vadd.f32 %v404, %v677
      %v679 = vpop.f32.mrf.mxu0
      %v680 = vpop.f32.mrf.mxu0
      %v681 = vadd.f32 %v404, %v680
      %v682 = vpop.f32.mrf.mxu0
      %683 = vmatprep.mubr.bf16.mxu0 0
      %684 = vmatmul.mubr.bf16.gmra.mxu0 %v543
      %v685 = vpop.f32.mrf.mxu0
      %v686 = vadd.f32 %v404, %v685
      %v687 = vpop.f32.mrf.mxu0
      %v688 = vpop.f32.mrf.mxu0
      %v689 = vadd.f32 %v404, %v688
      %v690 = vpop.f32.mrf.mxu0
      %691 = vmatprep.mubr.bf16.mxu0 0
      %692 = vmatmul.mubr.bf16.gmra.mxu0 %v546
      %v693 = vpop.f32.mrf.mxu0
      %v694 = vadd.f32 %v404, %v693
      %v695 = vpop.f32.mrf.mxu0
      %v696 = vpop.f32.mrf.mxu0
      %v697 = vadd.f32 %v404, %v696
      %v698 = vpop.f32.mrf.mxu0
      %699 = vmatprep.mubr.bf16.mxu0 0
      %700 = vmatmul.mubr.bf16.gmra.mxu0 %v549
      %v701 = vpop.f32.mrf.mxu0
      %v702 = vadd.f32 %v404, %v701
      %v703 = vpop.f32.mrf.mxu0
      %v704 = vpop.f32.mrf.mxu0
      %v705 = vadd.f32 %v404, %v704
      %v706 = vpop.f32.mrf.mxu0
      %707 = vmatprep.mubr.bf16.mxu0 0
      %708 = vmatmul.mubr.bf16.gmra.mxu0 %v552
      %v709 = vpop.f32.mrf.mxu0
      %v710 = vadd.f32 %v404, %v709
      %v711 = vpop.f32.mrf.mxu0
      %v712 = vpop.f32.mrf.mxu0
      %v713 = vadd.f32 %v404, %v712
      %v714 = vpop.f32.mrf.mxu0
      %715 = vmatprep.mubr.bf16.mxu0 0
      %716 = vmatmul.mubr.bf16.gmra.mxu0 %v555
      %v717 = vpop.f32.mrf.mxu0
      %v718 = vadd.f32 %v404, %v717
      %v719 = vpop.f32.mrf.mxu0
      %v720 = vpop.f32.mrf.mxu0
      %v721 = vadd.f32 %v404, %v720
      %v722 = vpop.f32.mrf.mxu0
      %723 = vmatprep.mubr.bf16.mxu0 0
      %724 = vmatmul.mubr.bf16.gmra.mxu0 %v558
      %v725 = vpop.f32.mrf.mxu0
      %v726 = vadd.f32 %v404, %v725
      %v727 = vpop.f32.mrf.mxu0
      %v728 = vpop.f32.mrf.mxu0
      %v729 = vadd.f32 %v404, %v728
      %v730 = vpop.f32.mrf.mxu0
      %731 = vmatprep.mubr.bf16.mxu0 0
      %732 = vmatmul.mubr.bf16.gmra.mxu0 %v561
      %v733 = vpop.f32.mrf.mxu0
      %v734 = vadd.f32 %v404, %v733
      %v735 = vpop.f32.mrf.mxu0
      %v736 = vpop.f32.mrf.mxu0
      %v737 = vadd.f32 %v404, %v736
      %v738 = vpop.f32.mrf.mxu0
      %739 = vdwg.mxu0
      %v740 = vmax.f32 %v598, 0.0
      %v741 = vmax.f32 %v601, 0.0
      %v742 = vmax.f32 %v606, 0.0
      %v743 = vmax.f32 %v609, 0.0
      %v744 = vmax.f32 %v614, 0.0
      %v745 = vmax.f32 %v617, 0.0
      %v746 = vmax.f32 %v622, 0.0
      %v747 = vmax.f32 %v625, 0.0
      %v748 = vmax.f32 %v630, 0.0
      %v749 = vmax.f32 %v633, 0.0
      %v750 = vmax.f32 %v638, 0.0
      %v751 = vmax.f32 %v641, 0.0
      %v752 = vmax.f32 %v646, 0.0
      %v753 = vmax.f32 %v649, 0.0
      %v754 = vmax.f32 %v654, 0.0
      %v755 = vmax.f32 %v657, 0.0
      %v756 = vmax.f32 %v662, 0.0
      %v757 = vmax.f32 %v665, 0.0
      %v758 = vmax.f32 %v670, 0.0
      %v759 = vmax.f32 %v673, 0.0
      %v760 = vmax.f32 %v678, 0.0
      %v761 = vmax.f32 %v681, 0.0
      %v762 = vmax.f32 %v686, 0.0
      %v763 = vmax.f32 %v689, 0.0
      %v764 = vmax.f32 %v694, 0.0
      %v765 = vmax.f32 %v697, 0.0
      %v766 = vmax.f32 %v702, 0.0
      %v767 = vmax.f32 %v705, 0.0
      %v768 = vmax.f32 %v710, 0.0
      %v769 = vmax.f32 %v713, 0.0
      %v770 = vmax.f32 %v718, 0.0
      %v771 = vmax.f32 %v721, 0.0
      %v772 = vmax.f32 %v726, 0.0
      %v773 = vmax.f32 %v729, 0.0
      %v774 = vmax.f32 %v734, 0.0
      %v775 = vmax.f32 %v737, 0.0
      %v776 = vld [vmem:[%s2] sm:$0xff]
      %v777 = vld [vmem:[%s2 + $0x8] sm:$0xff]
      %v778 = vld [vmem:[%s2 + $0x10] sm:$0xff]
      %v779 = vld [vmem:[%s2 + $0x18] sm:$0xff]
      %v780 = vld [vmem:[%s2 + $0x20] sm:$0xff]
      %v781 = vld [vmem:[%s2 + $0x28] sm:$0xff]
      %v782 = vld [vmem:[%s2 + $0x30] sm:$0xff]
      %v783 = vld [vmem:[%s2 + $0x38] sm:$0xff]
      %v784 = vld [vmem:[%s2 + $0x40] sm:$0xff]
      %v785 = vld [vmem:[%s2 + $0x48] sm:$0xff]
      %v786 = vld [vmem:[%s2 + $0x50] sm:$0xff]
      %v787 = vld [vmem:[%s2 + $0x58] sm:$0xff]
      %v788 = vld [vmem:[%s2 + $0x60] sm:$0xff]
      %v789 = vld [vmem:[%s2 + $0x68] sm:$0xff]
      %v790 = vld [vmem:[%s2 + $0x70] sm:$0xff]
      %v791 = vld [vmem:[%s2 + $0x78] sm:$0xff]
      %v792 = vld [vmem:[%s2 + $0x80] sm:$0xff]
      %v793 = vld [vmem:[%s2 + $0x88] sm:$0xff]
      %v794 = vld [vmem:[%s2 + $0x90] sm:$0xff]
      %v795 = vld [vmem:[%s2 + $0x98] sm:$0xff]
      %v796 = vld [vmem:[%s2 + $0xa0] sm:$0xff]
      %v797 = vld [vmem:[%s2 + $0xa8] sm:$0xff]
      %v798 = vld [vmem:[%s2 + $0xb0] sm:$0xff]
      %v799 = vld [vmem:[%s2 + $0xb8] sm:$0xff]
      %v800 = vld [vmem:[%s2 + $0xc0] sm:$0xff]
      %v801 = vld [vmem:[%s2 + $0xc8] sm:$0xff]
      %v802 = vld [vmem:[%s2 + $0xd0] sm:$0xff]
      %v803 = vld [vmem:[%s2 + $0xd8] sm:$0xff]
      %v804 = vld [vmem:[%s2 + $0xe0] sm:$0xff]
      %v805 = vld [vmem:[%s2 + $0xe8] sm:$0xff]
      %v806 = vld [vmem:[%s2 + $0xf0] sm:$0xff]
      %v807 = vld [vmem:[%s2 + $0xf8] sm:$0xff]
      %v808 = vld [vmem:[%s2 + $0x100] sm:$0xff]
      %v809 = vld [vmem:[%s2 + $0x108] sm:$0xff]
      %v810 = vld [vmem:[%s2 + $0x110] sm:$0xff]
      %v811 = vld [vmem:[%s2 + $0x118] sm:$0xff]
      %813 = vset.pattern.permute.xlu0 0
      %814 = vperm.xlu0 %813, %v776
      %v815 = vpop.permute.xlu0 %814
      %818 = vset.pattern.permute.xlu0 0
      %819 = vperm.xlu0 %818, %v777
      %v820 = vpop.permute.xlu0 %819
      %823 = vset.pattern.permute.xlu0 0
      %824 = vperm.xlu0 %823, %v778
      %v825 = vpop.permute.xlu0 %824
      %828 = vset.pattern.permute.xlu0 0
      %829 = vperm.xlu0 %828, %v779
      %v830 = vpop.permute.xlu0 %829
      %833 = vset.pattern.permute.xlu0 0
      %834 = vperm.xlu0 %833, %v780
      %v835 = vpop.permute.xlu0 %834
      %838 = vset.pattern.permute.xlu0 0
      %839 = vperm.xlu0 %838, %v781
      %v840 = vpop.permute.xlu0 %839
      %843 = vset.pattern.permute.xlu0 0
      %844 = vperm.xlu0 %843, %v782
      %v845 = vpop.permute.xlu0 %844
      %848 = vset.pattern.permute.xlu0 0
      %849 = vperm.xlu0 %848, %v783
      %v850 = vpop.permute.xlu0 %849
      %853 = vset.pattern.permute.xlu0 0
      %854 = vperm.xlu0 %853, %v784
      %v855 = vpop.permute.xlu0 %854
      %858 = vset.pattern.permute.xlu0 0
      %859 = vperm.xlu0 %858, %v785
      %v860 = vpop.permute.xlu0 %859
      %863 = vset.pattern.permute.xlu0 0
      %864 = vperm.xlu0 %863, %v786
      %v865 = vpop.permute.xlu0 %864
      %868 = vset.pattern.permute.xlu0 0
      %869 = vperm.xlu0 %868, %v787
      %v870 = vpop.permute.xlu0 %869
      %873 = vset.pattern.permute.xlu0 0
      %874 = vperm.xlu0 %873, %v788
      %v875 = vpop.permute.xlu0 %874
      %878 = vset.pattern.permute.xlu0 0
      %879 = vperm.xlu0 %878, %v789
      %v880 = vpop.permute.xlu0 %879
      %883 = vset.pattern.permute.xlu0 0
      %884 = vperm.xlu0 %883, %v790
      %v885 = vpop.permute.xlu0 %884
      %888 = vset.pattern.permute.xlu0 0
      %889 = vperm.xlu0 %888, %v791
      %v890 = vpop.permute.xlu0 %889
      %893 = vset.pattern.permute.xlu0 0
      %894 = vperm.xlu0 %893, %v792
      %v895 = vpop.permute.xlu0 %894
      %898 = vset.pattern.permute.xlu0 0
      %899 = vperm.xlu0 %898, %v793
      %v900 = vpop.permute.xlu0 %899
      %903 = vset.pattern.permute.xlu0 0
      %904 = vperm.xlu0 %903, %v794
      %v905 = vpop.permute.xlu0 %904
      %908 = vset.pattern.permute.xlu0 0
      %909 = vperm.xlu0 %908, %v795
      %v910 = vpop.permute.xlu0 %909
      %913 = vset.pattern.permute.xlu0 0
      %914 = vperm.xlu0 %913, %v796
      %v915 = vpop.permute.xlu0 %914
      %918 = vset.pattern.permute.xlu0 0
      %919 = vperm.xlu0 %918, %v797
      %v920 = vpop.permute.xlu0 %919
      %923 = vset.pattern.permute.xlu0 0
      %924 = vperm.xlu0 %923, %v798
      %v925 = vpop.permute.xlu0 %924
      %928 = vset.pattern.permute.xlu0 0
      %929 = vperm.xlu0 %928, %v799
      %v930 = vpop.permute.xlu0 %929
      %933 = vset.pattern.permute.xlu0 0
      %934 = vperm.xlu0 %933, %v800
      %v935 = vpop.permute.xlu0 %934
      %938 = vset.pattern.permute.xlu0 0
      %939 = vperm.xlu0 %938, %v801
      %v940 = vpop.permute.xlu0 %939
      %943 = vset.pattern.permute.xlu0 0
      %944 = vperm.xlu0 %943, %v802
      %v945 = vpop.permute.xlu0 %944
      %948 = vset.pattern.permute.xlu0 0
      %949 = vperm.xlu0 %948, %v803
      %v950 = vpop.permute.xlu0 %949
      %953 = vset.pattern.permute.xlu0 0
      %954 = vperm.xlu0 %953, %v804
      %v955 = vpop.permute.xlu0 %954
      %958 = vset.pattern.permute.xlu0 0
      %959 = vperm.xlu0 %958, %v805
      %v960 = vpop.permute.xlu0 %959
      %963 = vset.pattern.permute.xlu0 0
      %964 = vperm.xlu0 %963, %v806
      %v965 = vpop.permute.xlu0 %964
      %968 = vset.pattern.permute.xlu0 0
      %969 = vperm.xlu0 %968, %v807
      %v970 = vpop.permute.xlu0 %969
      %973 = vset.pattern.permute.xlu0 0
      %974 = vperm.xlu0 %973, %v808
      %v975 = vpop.permute.xlu0 %974
      %978 = vset.pattern.permute.xlu0 0
      %979 = vperm.xlu0 %978, %v809
      %v980 = vpop.permute.xlu0 %979
      %983 = vset.pattern.permute.xlu0 0
      %984 = vperm.xlu0 %983, %v810
      %v985 = vpop.permute.xlu0 %984
      %988 = vset.pattern.permute.xlu0 0
      %989 = vperm.xlu0 %988, %v811
      %v990 = vpop.permute.xlu0 %989
      %v992 = vmul.f32 %v740, %v815
      %v993 = vmul.f32 %v741, %v820
      %v994 = vmul.f32 %v742, %v825
      %v995 = vmul.f32 %v743, %v830
      %v996 = vmul.f32 %v744, %v835
      %v997 = vmul.f32 %v745, %v840
      %v998 = vmul.f32 %v746, %v845
      %v999 = vmul.f32 %v747, %v850
      %v1000 = vmul.f32 %v748, %v855
      %v1001 = vmul.f32 %v749, %v860
      %v1002 = vmul.f32 %v750, %v865
      %v1003 = vmul.f32 %v751, %v870
      %v1004 = vmul.f32 %v752, %v875
      %v1005 = vmul.f32 %v753, %v880
      %v1006 = vmul.f32 %v754, %v885
      %v1007 = vmul.f32 %v755, %v890
      %v1008 = vmul.f32 %v756, %v895
      %v1009 = vmul.f32 %v757, %v900
      %v1010 = vmul.f32 %v758, %v905
      %v1011 = vmul.f32 %v759, %v910
      %v1012 = vmul.f32 %v760, %v915
      %v1013 = vmul.f32 %v761, %v920
      %v1014 = vmul.f32 %v762, %v925
      %v1015 = vmul.f32 %v763, %v930
      %v1016 = vmul.f32 %v764, %v935
      %v1017 = vmul.f32 %v765, %v940
      %v1018 = vmul.f32 %v766, %v945
      %v1019 = vmul.f32 %v767, %v950
      %v1020 = vmul.f32 %v768, %v955
      %v1021 = vmul.f32 %v769, %v960
      %v1022 = vmul.f32 %v770, %v965
      %v1023 = vmul.f32 %v771, %v970
      %v1024 = vmul.f32 %v772, %v975
      %v1025 = vmul.f32 %v773, %v980
      %v1026 = vmul.f32 %v774, %v985
      %v1027 = vmul.f32 %v775, %v990
      %v1028 = vpack.c.bf16 %v993, %v992
      %v1029 = vpack.c.bf16 %v995, %v994
      %v1030 = vpack.c.bf16 %v997, %v996
      %v1031 = vpack.c.bf16 %v999, %v998
      %v1032 = vpack.c.bf16 %v1001, %v1000
      %v1033 = vpack.c.bf16 %v1003, %v1002
      %v1034 = vpack.c.bf16 %v1005, %v1004
      %v1035 = vpack.c.bf16 %v1007, %v1006
      %v1036 = vpack.c.bf16 %v1009, %v1008
      %v1037 = vpack.c.bf16 %v1011, %v1010
      %v1038 = vpack.c.bf16 %v1013, %v1012
      %v1039 = vpack.c.bf16 %v1015, %v1014
      %v1040 = vpack.c.bf16 %v1017, %v1016
      %v1041 = vpack.c.bf16 %v1019, %v1018
      %v1042 = vpack.c.bf16 %v1021, %v1020
      %v1043 = vpack.c.bf16 %v1023, %v1022
      %v1044 = vpack.c.bf16 %v1025, %v1024
      %v1045 = vpack.c.bf16 %v1027, %v1026
      %v1046 = vld [vmem:[%s6] sm:$0x1]
      %v1048 = vlaneseq
      %v1049 = vshrl.u32 %v1048, 7
      %v1050 = vsub.s32 0, %v1049
      %v1051 = vrot.slane %v1046, %v1050
      %v1053 = vld [vmem:[%s5] sm:$0xf]
      %v1054 = vld [vmem:[%s5 + $0x4] sm:$0xf]
      %v1057 = vunpack.c.l.b16 %v1053
      %v1058 = vunpack.c.l.b16 %v1054
      %v1059 = vpack.c.b16 %v1058, %v1057
      %vm1061 = vcmask 130048
      %v1063 = vsel %vm1061, %v1028, 0
      %v1066 = vsel %vm1061, %v1029, 0
      %1068 = vmatprep.subr.bf16.mxu0 0
      %1069 = vmatpush1.bf16.msra.mxu0 0
      %1070 = vmatprep.subr.bf16.mxu0 0
      %1071 = vmatpush1.bf16.msra.mxu0 0
      %1072 = vmatprep.subr.bf16.mxu0 0
      %1073 = vmatpush1.bf16.msra.mxu0 0
      %1074 = vmatprep.subr.bf16.mxu0 0
      %1075 = vmatpush1.bf16.msra.mxu0 0
      %1076 = vmatprep.subr.bf16.mxu0 0
      %1077 = vmatpush1.bf16.msra.mxu0 0
      %1078 = vmatprep.subr.bf16.mxu0 0
      %1079 = vmatpush1.bf16.msra.mxu0 0
      %1080 = vmatprep.subr.bf16.mxu0 0
      %1081 = vmatpush1.bf16.msra.mxu0 0
      %1082 = vmatprep.subr.bf16.mxu0 0
      %1083 = vmatpush1.bf16.msra.mxu0 %v1059
      %1084 = vmatprep.subr.bf16.mxu0 0
      %1085 = vmatpush2.bf16.msra.mxu0 0
      %1086 = vmatprep.subr.bf16.mxu0 0
      %1087 = vmatpush2.bf16.msra.mxu0 0
      %1088 = vmatprep.subr.bf16.mxu0 0
      %1089 = vmatpush2.bf16.msra.mxu0 0
      %1090 = vmatprep.subr.bf16.mxu0 0
      %1091 = vmatpush2.bf16.msra.mxu0 0
      %1092 = vmatprep.subr.bf16.mxu0 0
      %1093 = vmatpush2.bf16.msra.mxu0 0
      %1094 = vmatprep.subr.bf16.mxu0 0
      %1095 = vmatpush2.bf16.msra.mxu0 0
      %1096 = vmatprep.subr.bf16.mxu0 0
      %1097 = vmatpush2.bf16.msra.mxu0 0
      %1098 = vmatprep.subr.bf16.mxu0 0
      %1099 = vmatpush2.bf16.msra.mxu0 0
      %1100 = vmatprep.mubr.bf16.mxu0 0
      %1101 = vmatmul.mubr.bf16.gmra.mxu0 %v1063
      %v1102 = vpop.f32.mrf.mxu0
      %v1103 = vadd.f32 0.0, %v1102
      %v1104 = vpop.f32.mrf.mxu0
      %v1105 = vpop.f32.mrf.mxu0
      %v1106 = vadd.f32 0.0, %v1105
      %v1107 = vpop.f32.mrf.mxu0
      %1108 = vmatprep.mubr.bf16.mxu0 0
      %1109 = vmatmul.mubr.bf16.gmra.mxu0 %v1066
      %v1110 = vpop.f32.mrf.mxu0
      %v1111 = vadd.f32 0.0, %v1110
      %v1112 = vpop.f32.mrf.mxu0
      %v1113 = vpop.f32.mrf.mxu0
      %v1114 = vadd.f32 0.0, %v1113
      %v1115 = vpop.f32.mrf.mxu0
      %1116 = vdwg.mxu0
      %v1117 = vadd.f32 %v1051, %v1103
      %v1118 = vadd.f32 %v1051, %v1106
      %v1119 = vadd.f32 %v1051, %v1111
      %v1120 = vadd.f32 %v1051, %v1114
      %s1121 = scalar_lea.vmem %s5, 8
      %v1122 = vld [vmem:[%s1121] sm:$0xf]
      %v1123 = vld [vmem:[%s1121 + $0x4] sm:$0xf]
      %v1126 = vunpack.c.l.b16 %v1122
      %v1127 = vunpack.c.l.b16 %v1123
      %v1128 = vpack.c.b16 %v1127, %v1126
      %v1131 = vsel %vm1061, %v1030, 0
      %v1134 = vsel %vm1061, %v1031, 0
      %1136 = vmatprep.subr.bf16.mxu0 0
      %1137 = vmatpush1.bf16.msra.mxu0 0
      %1138 = vmatprep.subr.bf16.mxu0 0
      %1139 = vmatpush1.bf16.msra.mxu0 0
      %1140 = vmatprep.subr.bf16.mxu0 0
      %1141 = vmatpush1.bf16.msra.mxu0 0
      %1142 = vmatprep.subr.bf16.mxu0 0
      %1143 = vmatpush1.bf16.msra.mxu0 0
      %1144 = vmatprep.subr.bf16.mxu0 0
      %1145 = vmatpush1.bf16.msra.mxu0 0
      %1146 = vmatprep.subr.bf16.mxu0 0
      %1147 = vmatpush1.bf16.msra.mxu0 0
      %1148 = vmatprep.subr.bf16.mxu0 0
      %1149 = vmatpush1.bf16.msra.mxu0 0
      %1150 = vmatprep.subr.bf16.mxu0 0
      %1151 = vmatpush1.bf16.msra.mxu0 %v1128
      %1152 = vmatprep.subr.bf16.mxu0 0
      %1153 = vmatpush2.bf16.msra.mxu0 0
      %1154 = vmatprep.subr.bf16.mxu0 0
      %1155 = vmatpush2.bf16.msra.mxu0 0
      %1156 = vmatprep.subr.bf16.mxu0 0
      %1157 = vmatpush2.bf16.msra.mxu0 0
      %1158 = vmatprep.subr.bf16.mxu0 0
      %1159 = vmatpush2.bf16.msra.mxu0 0
      %1160 = vmatprep.subr.bf16.mxu0 0
      %1161 = vmatpush2.bf16.msra.mxu0 0
      %1162 = vmatprep.subr.bf16.mxu0 0
      %1163 = vmatpush2.bf16.msra.mxu0 0
      %1164 = vmatprep.subr.bf16.mxu0 0
      %1165 = vmatpush2.bf16.msra.mxu0 0
      %1166 = vmatprep.subr.bf16.mxu0 0
      %1167 = vmatpush2.bf16.msra.mxu0 0
      %1168 = vmatprep.mubr.bf16.mxu0 0
      %1169 = vmatmul.mubr.bf16.gmra.mxu0 %v1131
      %v1170 = vpop.f32.mrf.mxu0
      %v1171 = vadd.f32 0.0, %v1170
      %v1172 = vpop.f32.mrf.mxu0
      %v1173 = vpop.f32.mrf.mxu0
      %v1174 = vadd.f32 0.0, %v1173
      %v1175 = vpop.f32.mrf.mxu0
      %1176 = vmatprep.mubr.bf16.mxu0 0
      %1177 = vmatmul.mubr.bf16.gmra.mxu0 %v1134
      %v1178 = vpop.f32.mrf.mxu0
      %v1179 = vadd.f32 0.0, %v1178
      %v1180 = vpop.f32.mrf.mxu0
      %v1181 = vpop.f32.mrf.mxu0
      %v1182 = vadd.f32 0.0, %v1181
      %v1183 = vpop.f32.mrf.mxu0
      %1184 = vdwg.mxu0
      %v1185 = vadd.f32 %v1117, %v1171
      %v1186 = vadd.f32 %v1118, %v1174
      %v1187 = vadd.f32 %v1119, %v1179
      %v1188 = vadd.f32 %v1120, %v1182
      %s1189 = scalar_lea.vmem %s5, 16
      %v1190 = vld [vmem:[%s1189] sm:$0xf]
      %v1191 = vld [vmem:[%s1189 + $0x4] sm:$0xf]
      %v1194 = vunpack.c.l.b16 %v1190
      %v1195 = vunpack.c.l.b16 %v1191
      %v1196 = vpack.c.b16 %v1195, %v1194
      %v1199 = vsel %vm1061, %v1032, 0
      %v1202 = vsel %vm1061, %v1033, 0
      %1204 = vmatprep.subr.bf16.mxu0 0
      %1205 = vmatpush1.bf16.msra.mxu0 0
      %1206 = vmatprep.subr.bf16.mxu0 0
      %1207 = vmatpush1.bf16.msra.mxu0 0
      %1208 = vmatprep.subr.bf16.mxu0 0
      %1209 = vmatpush1.bf16.msra.mxu0 0
      %1210 = vmatprep.subr.bf16.mxu0 0
      %1211 = vmatpush1.bf16.msra.mxu0 0
      %1212 = vmatprep.subr.bf16.mxu0 0
      %1213 = vmatpush1.bf16.msra.mxu0 0
      %1214 = vmatprep.subr.bf16.mxu0 0
      %1215 = vmatpush1.bf16.msra.mxu0 0
      %1216 = vmatprep.subr.bf16.mxu0 0
      %1217 = vmatpush1.bf16.msra.mxu0 0
      %1218 = vmatprep.subr.bf16.mxu0 0
      %1219 = vmatpush1.bf16.msra.mxu0 %v1196
      %1220 = vmatprep.subr.bf16.mxu0 0
      %1221 = vmatpush2.bf16.msra.mxu0 0
      %1222 = vmatprep.subr.bf16.mxu0 0
      %1223 = vmatpush2.bf16.msra.mxu0 0
      %1224 = vmatprep.subr.bf16.mxu0 0
      %1225 = vmatpush2.bf16.msra.mxu0 0
      %1226 = vmatprep.subr.bf16.mxu0 0
      %1227 = vmatpush2.bf16.msra.mxu0 0
      %1228 = vmatprep.subr.bf16.mxu0 0
      %1229 = vmatpush2.bf16.msra.mxu0 0
      %1230 = vmatprep.subr.bf16.mxu0 0
      %1231 = vmatpush2.bf16.msra.mxu0 0
      %1232 = vmatprep.subr.bf16.mxu0 0
      %1233 = vmatpush2.bf16.msra.mxu0 0
      %1234 = vmatprep.subr.bf16.mxu0 0
      %1235 = vmatpush2.bf16.msra.mxu0 0
      %1236 = vmatprep.mubr.bf16.mxu0 0
      %1237 = vmatmul.mubr.bf16.gmra.mxu0 %v1199
      %v1238 = vpop.f32.mrf.mxu0
      %v1239 = vadd.f32 0.0, %v1238
      %v1240 = vpop.f32.mrf.mxu0
      %v1241 = vpop.f32.mrf.mxu0
      %v1242 = vadd.f32 0.0, %v1241
      %v1243 = vpop.f32.mrf.mxu0
      %1244 = vmatprep.mubr.bf16.mxu0 0
      %1245 = vmatmul.mubr.bf16.gmra.mxu0 %v1202
      %v1246 = vpop.f32.mrf.mxu0
      %v1247 = vadd.f32 0.0, %v1246
      %v1248 = vpop.f32.mrf.mxu0
      %v1249 = vpop.f32.mrf.mxu0
      %v1250 = vadd.f32 0.0, %v1249
      %v1251 = vpop.f32.mrf.mxu0
      %1252 = vdwg.mxu0
      %v1253 = vadd.f32 %v1185, %v1239
      %v1254 = vadd.f32 %v1186, %v1242
      %v1255 = vadd.f32 %v1187, %v1247
      %v1256 = vadd.f32 %v1188, %v1250
      %s1257 = scalar_lea.vmem %s5, 24
      %v1258 = vld [vmem:[%s1257] sm:$0xf]
      %v1259 = vld [vmem:[%s1257 + $0x4] sm:$0xf]
      %v1262 = vunpack.c.l.b16 %v1258
      %v1263 = vunpack.c.l.b16 %v1259
      %v1264 = vpack.c.b16 %v1263, %v1262
      %v1267 = vsel %vm1061, %v1034, 0
      %v1270 = vsel %vm1061, %v1035, 0
      %1272 = vmatprep.subr.bf16.mxu0 0
      %1273 = vmatpush1.bf16.msra.mxu0 0
      %1274 = vmatprep.subr.bf16.mxu0 0
      %1275 = vmatpush1.bf16.msra.mxu0 0
      %1276 = vmatprep.subr.bf16.mxu0 0
      %1277 = vmatpush1.bf16.msra.mxu0 0
      %1278 = vmatprep.subr.bf16.mxu0 0
      %1279 = vmatpush1.bf16.msra.mxu0 0
      %1280 = vmatprep.subr.bf16.mxu0 0
      %1281 = vmatpush1.bf16.msra.mxu0 0
      %1282 = vmatprep.subr.bf16.mxu0 0
      %1283 = vmatpush1.bf16.msra.mxu0 0
      %1284 = vmatprep.subr.bf16.mxu0 0
      %1285 = vmatpush1.bf16.msra.mxu0 0
      %1286 = vmatprep.subr.bf16.mxu0 0
      %1287 = vmatpush1.bf16.msra.mxu0 %v1264
      %1288 = vmatprep.subr.bf16.mxu0 0
      %1289 = vmatpush2.bf16.msra.mxu0 0
      %1290 = vmatprep.subr.bf16.mxu0 0
      %1291 = vmatpush2.bf16.msra.mxu0 0
      %1292 = vmatprep.subr.bf16.mxu0 0
      %1293 = vmatpush2.bf16.msra.mxu0 0
      %1294 = vmatprep.subr.bf16.mxu0 0
      %1295 = vmatpush2.bf16.msra.mxu0 0
      %1296 = vmatprep.subr.bf16.mxu0 0
      %1297 = vmatpush2.bf16.msra.mxu0 0
      %1298 = vmatprep.subr.bf16.mxu0 0
      %1299 = vmatpush2.bf16.msra.mxu0 0
      %1300 = vmatprep.subr.bf16.mxu0 0
      %1301 = vmatpush2.bf16.msra.mxu0 0
      %1302 = vmatprep.subr.bf16.mxu0 0
      %1303 = vmatpush2.bf16.msra.mxu0 0
      %1304 = vmatprep.mubr.bf16.mxu0 0
      %1305 = vmatmul.mubr.bf16.gmra.mxu0 %v1267
      %v1306 = vpop.f32.mrf.mxu0
      %v1307 = vadd.f32 0.0, %v1306
      %v1308 = vpop.f32.mrf.mxu0
      %v1309 = vpop.f32.mrf.mxu0
      %v1310 = vadd.f32 0.0, %v1309
      %v1311 = vpop.f32.mrf.mxu0
      %1312 = vmatprep.mubr.bf16.mxu0 0
      %1313 = vmatmul.mubr.bf16.gmra.mxu0 %v1270
      %v1314 = vpop.f32.mrf.mxu0
      %v1315 = vadd.f32 0.0, %v1314
      %v1316 = vpop.f32.mrf.mxu0
      %v1317 = vpop.f32.mrf.mxu0
      %v1318 = vadd.f32 0.0, %v1317
      %v1319 = vpop.f32.mrf.mxu0
      %1320 = vdwg.mxu0
      %v1321 = vadd.f32 %v1253, %v1307
      %v1322 = vadd.f32 %v1254, %v1310
      %v1323 = vadd.f32 %v1255, %v1315
      %v1324 = vadd.f32 %v1256, %v1318
      %s1325 = scalar_lea.vmem %s5, 32
      %v1326 = vld [vmem:[%s1325] sm:$0xf]
      %v1327 = vld [vmem:[%s1325 + $0x4] sm:$0xf]
      %v1330 = vunpack.c.l.b16 %v1326
      %v1331 = vunpack.c.l.b16 %v1327
      %v1332 = vpack.c.b16 %v1331, %v1330
      %v1335 = vsel %vm1061, %v1036, 0
      %v1338 = vsel %vm1061, %v1037, 0
      %1340 = vmatprep.subr.bf16.mxu0 0
      %1341 = vmatpush1.bf16.msra.mxu0 0
      %1342 = vmatprep.subr.bf16.mxu0 0
      %1343 = vmatpush1.bf16.msra.mxu0 0
      %1344 = vmatprep.subr.bf16.mxu0 0
      %1345 = vmatpush1.bf16.msra.mxu0 0
      %1346 = vmatprep.subr.bf16.mxu0 0
      %1347 = vmatpush1.bf16.msra.mxu0 0
      %1348 = vmatprep.subr.bf16.mxu0 0
      %1349 = vmatpush1.bf16.msra.mxu0 0
      %1350 = vmatprep.subr.bf16.mxu0 0
      %1351 = vmatpush1.bf16.msra.mxu0 0
      %1352 = vmatprep.subr.bf16.mxu0 0
      %1353 = vmatpush1.bf16.msra.mxu0 0
      %1354 = vmatprep.subr.bf16.mxu0 0
      %1355 = vmatpush1.bf16.msra.mxu0 %v1332
      %1356 = vmatprep.subr.bf16.mxu0 0
      %1357 = vmatpush2.bf16.msra.mxu0 0
      %1358 = vmatprep.subr.bf16.mxu0 0
      %1359 = vmatpush2.bf16.msra.mxu0 0
      %1360 = vmatprep.subr.bf16.mxu0 0
      %1361 = vmatpush2.bf16.msra.mxu0 0
      %1362 = vmatprep.subr.bf16.mxu0 0
      %1363 = vmatpush2.bf16.msra.mxu0 0
      %1364 = vmatprep.subr.bf16.mxu0 0
      %1365 = vmatpush2.bf16.msra.mxu0 0
      %1366 = vmatprep.subr.bf16.mxu0 0
      %1367 = vmatpush2.bf16.msra.mxu0 0
      %1368 = vmatprep.subr.bf16.mxu0 0
      %1369 = vmatpush2.bf16.msra.mxu0 0
      %1370 = vmatprep.subr.bf16.mxu0 0
      %1371 = vmatpush2.bf16.msra.mxu0 0
      %1372 = vmatprep.mubr.bf16.mxu0 0
      %1373 = vmatmul.mubr.bf16.gmra.mxu0 %v1335
      %v1374 = vpop.f32.mrf.mxu0
      %v1375 = vadd.f32 0.0, %v1374
      %v1376 = vpop.f32.mrf.mxu0
      %v1377 = vpop.f32.mrf.mxu0
      %v1378 = vadd.f32 0.0, %v1377
      %v1379 = vpop.f32.mrf.mxu0
      %1380 = vmatprep.mubr.bf16.mxu0 0
      %1381 = vmatmul.mubr.bf16.gmra.mxu0 %v1338
      %v1382 = vpop.f32.mrf.mxu0
      %v1383 = vadd.f32 0.0, %v1382
      %v1384 = vpop.f32.mrf.mxu0
      %v1385 = vpop.f32.mrf.mxu0
      %v1386 = vadd.f32 0.0, %v1385
      %v1387 = vpop.f32.mrf.mxu0
      %1388 = vdwg.mxu0
      %v1389 = vadd.f32 %v1321, %v1375
      %v1390 = vadd.f32 %v1322, %v1378
      %v1391 = vadd.f32 %v1323, %v1383
      %v1392 = vadd.f32 %v1324, %v1386
      %s1393 = scalar_lea.vmem %s5, 40
      %v1394 = vld [vmem:[%s1393] sm:$0xf]
      %v1395 = vld [vmem:[%s1393 + $0x4] sm:$0xf]
      %v1398 = vunpack.c.l.b16 %v1394
      %v1399 = vunpack.c.l.b16 %v1395
      %v1400 = vpack.c.b16 %v1399, %v1398
      %v1403 = vsel %vm1061, %v1038, 0
      %v1406 = vsel %vm1061, %v1039, 0
      %1408 = vmatprep.subr.bf16.mxu0 0
      %1409 = vmatpush1.bf16.msra.mxu0 0
      %1410 = vmatprep.subr.bf16.mxu0 0
      %1411 = vmatpush1.bf16.msra.mxu0 0
      %1412 = vmatprep.subr.bf16.mxu0 0
      %1413 = vmatpush1.bf16.msra.mxu0 0
      %1414 = vmatprep.subr.bf16.mxu0 0
      %1415 = vmatpush1.bf16.msra.mxu0 0
      %1416 = vmatprep.subr.bf16.mxu0 0
      %1417 = vmatpush1.bf16.msra.mxu0 0
      %1418 = vmatprep.subr.bf16.mxu0 0
      %1419 = vmatpush1.bf16.msra.mxu0 0
      %1420 = vmatprep.subr.bf16.mxu0 0
      %1421 = vmatpush1.bf16.msra.mxu0 0
      %1422 = vmatprep.subr.bf16.mxu0 0
      %1423 = vmatpush1.bf16.msra.mxu0 %v1400
      %1424 = vmatprep.subr.bf16.mxu0 0
      %1425 = vmatpush2.bf16.msra.mxu0 0
      %1426 = vmatprep.subr.bf16.mxu0 0
      %1427 = vmatpush2.bf16.msra.mxu0 0
      %1428 = vmatprep.subr.bf16.mxu0 0
      %1429 = vmatpush2.bf16.msra.mxu0 0
      %1430 = vmatprep.subr.bf16.mxu0 0
      %1431 = vmatpush2.bf16.msra.mxu0 0
      %1432 = vmatprep.subr.bf16.mxu0 0
      %1433 = vmatpush2.bf16.msra.mxu0 0
      %1434 = vmatprep.subr.bf16.mxu0 0
      %1435 = vmatpush2.bf16.msra.mxu0 0
      %1436 = vmatprep.subr.bf16.mxu0 0
      %1437 = vmatpush2.bf16.msra.mxu0 0
      %1438 = vmatprep.subr.bf16.mxu0 0
      %1439 = vmatpush2.bf16.msra.mxu0 0
      %1440 = vmatprep.mubr.bf16.mxu0 0
      %1441 = vmatmul.mubr.bf16.gmra.mxu0 %v1403
      %v1442 = vpop.f32.mrf.mxu0
      %v1443 = vadd.f32 0.0, %v1442
      %v1444 = vpop.f32.mrf.mxu0
      %v1445 = vpop.f32.mrf.mxu0
      %v1446 = vadd.f32 0.0, %v1445
      %v1447 = vpop.f32.mrf.mxu0
      %1448 = vmatprep.mubr.bf16.mxu0 0
      %1449 = vmatmul.mubr.bf16.gmra.mxu0 %v1406
      %v1450 = vpop.f32.mrf.mxu0
      %v1451 = vadd.f32 0.0, %v1450
      %v1452 = vpop.f32.mrf.mxu0
      %v1453 = vpop.f32.mrf.mxu0
      %v1454 = vadd.f32 0.0, %v1453
      %v1455 = vpop.f32.mrf.mxu0
      %1456 = vdwg.mxu0
      %v1457 = vadd.f32 %v1389, %v1443
      %v1458 = vadd.f32 %v1390, %v1446
      %v1459 = vadd.f32 %v1391, %v1451
      %v1460 = vadd.f32 %v1392, %v1454
      %s1461 = scalar_lea.vmem %s5, 48
      %v1462 = vld [vmem:[%s1461] sm:$0xf]
      %v1463 = vld [vmem:[%s1461 + $0x4] sm:$0xf]
      %v1466 = vunpack.c.l.b16 %v1462
      %v1467 = vunpack.c.l.b16 %v1463
      %v1468 = vpack.c.b16 %v1467, %v1466
      %v1471 = vsel %vm1061, %v1040, 0
      %v1474 = vsel %vm1061, %v1041, 0
      %1476 = vmatprep.subr.bf16.mxu0 0
      %1477 = vmatpush1.bf16.msra.mxu0 0
      %1478 = vmatprep.subr.bf16.mxu0 0
      %1479 = vmatpush1.bf16.msra.mxu0 0
      %1480 = vmatprep.subr.bf16.mxu0 0
      %1481 = vmatpush1.bf16.msra.mxu0 0
      %1482 = vmatprep.subr.bf16.mxu0 0
      %1483 = vmatpush1.bf16.msra.mxu0 0
      %1484 = vmatprep.subr.bf16.mxu0 0
      %1485 = vmatpush1.bf16.msra.mxu0 0
      %1486 = vmatprep.subr.bf16.mxu0 0
      %1487 = vmatpush1.bf16.msra.mxu0 0
      %1488 = vmatprep.subr.bf16.mxu0 0
      %1489 = vmatpush1.bf16.msra.mxu0 0
      %1490 = vmatprep.subr.bf16.mxu0 0
      %1491 = vmatpush1.bf16.msra.mxu0 %v1468
      %1492 = vmatprep.subr.bf16.mxu0 0
      %1493 = vmatpush2.bf16.msra.mxu0 0
      %1494 = vmatprep.subr.bf16.mxu0 0
      %1495 = vmatpush2.bf16.msra.mxu0 0
      %1496 = vmatprep.subr.bf16.mxu0 0
      %1497 = vmatpush2.bf16.msra.mxu0 0
      %1498 = vmatprep.subr.bf16.mxu0 0
      %1499 = vmatpush2.bf16.msra.mxu0 0
      %1500 = vmatprep.subr.bf16.mxu0 0
      %1501 = vmatpush2.bf16.msra.mxu0 0
      %1502 = vmatprep.subr.bf16.mxu0 0
      %1503 = vmatpush2.bf16.msra.mxu0 0
      %1504 = vmatprep.subr.bf16.mxu0 0
      %1505 = vmatpush2.bf16.msra.mxu0 0
      %1506 = vmatprep.subr.bf16.mxu0 0
      %1507 = vmatpush2.bf16.msra.mxu0 0
      %1508 = vmatprep.mubr.bf16.mxu0 0
      %1509 = vmatmul.mubr.bf16.gmra.mxu0 %v1471
      %v1510 = vpop.f32.mrf.mxu0
      %v1511 = vadd.f32 0.0, %v1510
      %v1512 = vpop.f32.mrf.mxu0
      %v1513 = vpop.f32.mrf.mxu0
      %v1514 = vadd.f32 0.0, %v1513
      %v1515 = vpop.f32.mrf.mxu0
      %1516 = vmatprep.mubr.bf16.mxu0 0
      %1517 = vmatmul.mubr.bf16.gmra.mxu0 %v1474
      %v1518 = vpop.f32.mrf.mxu0
      %v1519 = vadd.f32 0.0, %v1518
      %v1520 = vpop.f32.mrf.mxu0
      %v1521 = vpop.f32.mrf.mxu0
      %v1522 = vadd.f32 0.0, %v1521
      %v1523 = vpop.f32.mrf.mxu0
      %1524 = vdwg.mxu0
      %v1525 = vadd.f32 %v1457, %v1511
      %v1526 = vadd.f32 %v1458, %v1514
      %v1527 = vadd.f32 %v1459, %v1519
      %v1528 = vadd.f32 %v1460, %v1522
      %s1529 = scalar_lea.vmem %s5, 56
      %v1530 = vld [vmem:[%s1529] sm:$0xf]
      %v1531 = vld [vmem:[%s1529 + $0x4] sm:$0xf]
      %v1534 = vunpack.c.l.b16 %v1530
      %v1535 = vunpack.c.l.b16 %v1531
      %v1536 = vpack.c.b16 %v1535, %v1534
      %v1539 = vsel %vm1061, %v1042, 0
      %v1542 = vsel %vm1061, %v1043, 0
      %1544 = vmatprep.subr.bf16.mxu0 0
      %1545 = vmatpush1.bf16.msra.mxu0 0
      %1546 = vmatprep.subr.bf16.mxu0 0
      %1547 = vmatpush1.bf16.msra.mxu0 0
      %1548 = vmatprep.subr.bf16.mxu0 0
      %1549 = vmatpush1.bf16.msra.mxu0 0
      %1550 = vmatprep.subr.bf16.mxu0 0
      %1551 = vmatpush1.bf16.msra.mxu0 0
      %1552 = vmatprep.subr.bf16.mxu0 0
      %1553 = vmatpush1.bf16.msra.mxu0 0
      %1554 = vmatprep.subr.bf16.mxu0 0
      %1555 = vmatpush1.bf16.msra.mxu0 0
      %1556 = vmatprep.subr.bf16.mxu0 0
      %1557 = vmatpush1.bf16.msra.mxu0 0
      %1558 = vmatprep.subr.bf16.mxu0 0
      %1559 = vmatpush1.bf16.msra.mxu0 %v1536
      %1560 = vmatprep.subr.bf16.mxu0 0
      %1561 = vmatpush2.bf16.msra.mxu0 0
      %1562 = vmatprep.subr.bf16.mxu0 0
      %1563 = vmatpush2.bf16.msra.mxu0 0
      %1564 = vmatprep.subr.bf16.mxu0 0
      %1565 = vmatpush2.bf16.msra.mxu0 0
      %1566 = vmatprep.subr.bf16.mxu0 0
      %1567 = vmatpush2.bf16.msra.mxu0 0
      %1568 = vmatprep.subr.bf16.mxu0 0
      %1569 = vmatpush2.bf16.msra.mxu0 0
      %1570 = vmatprep.subr.bf16.mxu0 0
      %1571 = vmatpush2.bf16.msra.mxu0 0
      %1572 = vmatprep.subr.bf16.mxu0 0
      %1573 = vmatpush2.bf16.msra.mxu0 0
      %1574 = vmatprep.subr.bf16.mxu0 0
      %1575 = vmatpush2.bf16.msra.mxu0 0
      %1576 = vmatprep.mubr.bf16.mxu0 0
      %1577 = vmatmul.mubr.bf16.gmra.mxu0 %v1539
      %v1578 = vpop.f32.mrf.mxu0
      %v1579 = vadd.f32 0.0, %v1578
      %v1580 = vpop.f32.mrf.mxu0
      %v1581 = vpop.f32.mrf.mxu0
      %v1582 = vadd.f32 0.0, %v1581
      %v1583 = vpop.f32.mrf.mxu0
      %1584 = vmatprep.mubr.bf16.mxu0 0
      %1585 = vmatmul.mubr.bf16.gmra.mxu0 %v1542
      %v1586 = vpop.f32.mrf.mxu0
      %v1587 = vadd.f32 0.0, %v1586
      %v1588 = vpop.f32.mrf.mxu0
      %v1589 = vpop.f32.mrf.mxu0
      %v1590 = vadd.f32 0.0, %v1589
      %v1591 = vpop.f32.mrf.mxu0
      %1592 = vdwg.mxu0
      %v1593 = vadd.f32 %v1525, %v1579
      %v1594 = vadd.f32 %v1526, %v1582
      %v1595 = vadd.f32 %v1527, %v1587
      %v1596 = vadd.f32 %v1528, %v1590
      %s1597 = scalar_lea.vmem %s5, 64
      %v1598 = vld [vmem:[%s1597] sm:$0xf]
      %v1599 = vld [vmem:[%s1597 + $0x4] sm:$0xf]
      %v1602 = vunpack.c.l.b16 %v1598
      %v1603 = vunpack.c.l.b16 %v1599
      %v1604 = vpack.c.b16 %v1603, %v1602
      %v1607 = vsel %vm1061, %v1044, 0
      %v1610 = vsel %vm1061, %v1045, 0
      %1612 = vmatprep.subr.bf16.mxu0 0
      %1613 = vmatpush1.bf16.msra.mxu0 0
      %1614 = vmatprep.subr.bf16.mxu0 0
      %1615 = vmatpush1.bf16.msra.mxu0 0
      %1616 = vmatprep.subr.bf16.mxu0 0
      %1617 = vmatpush1.bf16.msra.mxu0 0
      %1618 = vmatprep.subr.bf16.mxu0 0
      %1619 = vmatpush1.bf16.msra.mxu0 0
      %1620 = vmatprep.subr.bf16.mxu0 0
      %1621 = vmatpush1.bf16.msra.mxu0 0
      %1622 = vmatprep.subr.bf16.mxu0 0
      %1623 = vmatpush1.bf16.msra.mxu0 0
      %1624 = vmatprep.subr.bf16.mxu0 0
      %1625 = vmatpush1.bf16.msra.mxu0 0
      %1626 = vmatprep.subr.bf16.mxu0 0
      %1627 = vmatpush1.bf16.msra.mxu0 %v1604
      %1628 = vmatprep.subr.bf16.mxu0 0
      %1629 = vmatpush2.bf16.msra.mxu0 0
      %1630 = vmatprep.subr.bf16.mxu0 0
      %1631 = vmatpush2.bf16.msra.mxu0 0
      %1632 = vmatprep.subr.bf16.mxu0 0
      %1633 = vmatpush2.bf16.msra.mxu0 0
      %1634 = vmatprep.subr.bf16.mxu0 0
      %1635 = vmatpush2.bf16.msra.mxu0 0
      %1636 = vmatprep.subr.bf16.mxu0 0
      %1637 = vmatpush2.bf16.msra.mxu0 0
      %1638 = vmatprep.subr.bf16.mxu0 0
      %1639 = vmatpush2.bf16.msra.mxu0 0
      %1640 = vmatprep.subr.bf16.mxu0 0
      %1641 = vmatpush2.bf16.msra.mxu0 0
      %1642 = vmatprep.subr.bf16.mxu0 0
      %1643 = vmatpush2.bf16.msra.mxu0 0
      %1644 = vmatprep.mubr.bf16.mxu0 0
      %1645 = vmatmul.mubr.bf16.gmra.mxu0 %v1607
      %v1646 = vpop.f32.mrf.mxu0
      %v1647 = vadd.f32 0.0, %v1646
      %v1648 = vpop.f32.mrf.mxu0
      %v1649 = vpop.f32.mrf.mxu0
      %v1650 = vadd.f32 0.0, %v1649
      %v1651 = vpop.f32.mrf.mxu0
      %1652 = vmatprep.mubr.bf16.mxu0 0
      %1653 = vmatmul.mubr.bf16.gmra.mxu0 %v1610
      %v1654 = vpop.f32.mrf.mxu0
      %v1655 = vadd.f32 0.0, %v1654
      %v1656 = vpop.f32.mrf.mxu0
      %v1657 = vpop.f32.mrf.mxu0
      %v1658 = vadd.f32 0.0, %v1657
      %v1659 = vpop.f32.mrf.mxu0
      %1660 = vdwg.mxu0
      %v1661 = vadd.f32 %v1593, %v1647
      %v1662 = vadd.f32 %v1594, %v1650
      %v1663 = vadd.f32 %v1595, %v1655
      %v1664 = vadd.f32 %v1596, %v1658
      %v1665 = vmax.f32 %v1661, 0.0
      %v1666 = vmax.f32 %v1662, 0.0
      %v1667 = vmax.f32 %v1663, 0.0
      %v1668 = vmax.f32 %v1664, 0.0
      %v1669 = vpack.c.bf16 %v1666, %v1665
      %v1670 = vpack.c.bf16 %v1668, %v1667
      %v1671 = vld [vmem:[%s7] sm:$0xf]
      %v1672 = vld [vmem:[%s7 + $0x4] sm:$0xf]
      %v1673 = vld [vmem:[%s8] sm:$0x1]
      %v1675 = vlaneseq
      %v1676 = vshrl.u32 %v1675, 7
      %v1677 = vsub.s32 0, %v1676
      %v1678 = vrot.slane %v1673, %v1677
      %v1682 = vunpack.c.l.b16 %v1671
      %v1683 = vunpack.c.l.b16 %v1672
      %v1684 = vpack.c.b16 %v1683, %v1682
      %v1687 = vsel %vm1061, %v1669, 0
      %v1690 = vsel %vm1061, %v1670, 0
      %1692 = vmatprep.subr.bf16.mxu0 0
      %1693 = vmatpush1.bf16.msra.mxu0 0
      %1694 = vmatprep.subr.bf16.mxu0 0
      %1695 = vmatpush1.bf16.msra.mxu0 0
      %1696 = vmatprep.subr.bf16.mxu0 0
      %1697 = vmatpush1.bf16.msra.mxu0 0
      %1698 = vmatprep.subr.bf16.mxu0 0
      %1699 = vmatpush1.bf16.msra.mxu0 0
      %1700 = vmatprep.subr.bf16.mxu0 0
      %1701 = vmatpush1.bf16.msra.mxu0 0
      %1702 = vmatprep.subr.bf16.mxu0 0
      %1703 = vmatpush1.bf16.msra.mxu0 0
      %1704 = vmatprep.subr.bf16.mxu0 0
      %1705 = vmatpush1.bf16.msra.mxu0 0
      %1706 = vmatprep.subr.bf16.mxu0 0
      %1707 = vmatpush1.bf16.msra.mxu0 %v1684
      %1708 = vmatprep.subr.bf16.mxu0 0
      %1709 = vmatpush2.bf16.msra.mxu0 0
      %1710 = vmatprep.subr.bf16.mxu0 0
      %1711 = vmatpush2.bf16.msra.mxu0 0
      %1712 = vmatprep.subr.bf16.mxu0 0
      %1713 = vmatpush2.bf16.msra.mxu0 0
      %1714 = vmatprep.subr.bf16.mxu0 0
      %1715 = vmatpush2.bf16.msra.mxu0 0
      %1716 = vmatprep.subr.bf16.mxu0 0
      %1717 = vmatpush2.bf16.msra.mxu0 0
      %1718 = vmatprep.subr.bf16.mxu0 0
      %1719 = vmatpush2.bf16.msra.mxu0 0
      %1720 = vmatprep.subr.bf16.mxu0 0
      %1721 = vmatpush2.bf16.msra.mxu0 0
      %1722 = vmatprep.subr.bf16.mxu0 0
      %1723 = vmatpush2.bf16.msra.mxu0 0
      %1724 = vmatprep.mubr.bf16.mxu0 0
      %1725 = vmatmul.mubr.bf16.gmra.mxu0 %v1687
      %v1726 = vpop.f32.mrf.mxu0
      %v1727 = vadd.f32 %v1678, %v1726
      %v1728 = vpop.f32.mrf.mxu0
      %v1729 = vpop.f32.mrf.mxu0
      %v1730 = vadd.f32 %v1678, %v1729
      %v1731 = vpop.f32.mrf.mxu0
      %1732 = vmatprep.mubr.bf16.mxu0 0
      %1733 = vmatmul.mubr.bf16.gmra.mxu0 %v1690
      %v1734 = vpop.f32.mrf.mxu0
      %v1735 = vadd.f32 %v1678, %v1734
      %v1736 = vpop.f32.mrf.mxu0
      %v1737 = vpop.f32.mrf.mxu0
      %v1738 = vadd.f32 %v1678, %v1737
      %v1739 = vpop.f32.mrf.mxu0
      %1740 = vdwg.mxu0
      %v1741 = vld [vmem:[%s350] sm:$0xff]
      %v1742 = vld [vmem:[%s350 + $0x8] sm:$0xff]
      %v1743 = vld [vmem:[%s350 + $0x10] sm:$0xff]
      %v1744 = vld [vmem:[%s350 + $0x18] sm:$0xff]
      %v1745 = vadd.f32 %v1727, %v1741
      %v1746 = vadd.f32 %v1730, %v1742
      %v1747 = vadd.f32 %v1735, %v1743
      %v1748 = vadd.f32 %v1738, %v1744
      %v1749 = vmax.f32 %v1745, 0.0
      %v1750 = vmax.f32 %v1746, 0.0
      %v1751 = vmax.f32 %v1747, 0.0
      %v1752 = vmax.f32 %v1748, 0.0
      %1753 = vst.msk [vmem:[%s356] sm:$0xff] %vm508, %v1749
      %1754 = vst.msk [vmem:[%s356 + $0x8] sm:$0xff] %vm508, %v1750
      %1755 = vst.msk [vmem:[%s356 + $0x10] sm:$0xff] %vm508, %v1751
      %1756 = vst.msk [vmem:[%s356 + $0x18] sm:$0xff] %vm508, %v1752
      %v1757 = vld [vmem:[%s350 + $0x20] sm:$0xff]
      %v1758 = vld [vmem:[%s350 + $0x28] sm:$0xff]
      %v1759 = vld [vmem:[%s350 + $0x30] sm:$0xff]
      %v1760 = vld [vmem:[%s350 + $0x38] sm:$0xff]
      %v1761 = vadd.f32 %v1678, %v1757
      %v1762 = vadd.f32 %v1678, %v1758
      %v1763 = vadd.f32 %v1678, %v1759
      %v1764 = vadd.f32 %v1678, %v1760
      %v1765 = vmax.f32 %v1761, 0.0
      %v1766 = vmax.f32 %v1762, 0.0
      %v1767 = vmax.f32 %v1763, 0.0
      %v1768 = vmax.f32 %v1764, 0.0
      %1769 = vst.msk [vmem:[%s356 + $0x20] sm:$0xff] %vm508, %v1765
      %1770 = vst.msk [vmem:[%s356 + $0x28] sm:$0xff] %vm508, %v1766
      %1771 = vst.msk [vmem:[%s356 + $0x30] sm:$0xff] %vm508, %v1767
      %1772 = vst.msk [vmem:[%s356 + $0x38] sm:$0xff] %vm508, %v1768
      %s1773 = smul.u32 8, %s20
      %p1774 = scmp.lt.s32.totalorder %s1773, 15
      %s1775 = scalar_select %p1774, %s1773, 15
      %s1776 = smul.addr %s1775, 8
      %s1777 = scalar_lea.vmem %s9, %s1776
      // Predicated region
      $region57: #{forward.1} parent=55 // pred_check
        %p1778 = pneg %p237
      $region58: #{forward.1} parent=55 // pred_check_branch
        %1780 = sbr.rel (%p1778) target = $region60
      $region59: #{forward.1} parent=55 // pred_region
        %s1781 = smul.u32 8, %s20
      $region60: #{forward.1} parent=55 // pred_fallthru
        _
    $region56: #{forward.1} parent=5 // pred_fallthru
      _
    %p1782 = scmp.le.s32.totalorder 2, %s15
    // Predicated region
    $region61: #{forward.1} parent=5 // pred_check
      %p1783 = pneg %p1782
    $region62: #{forward.1} parent=5 // pred_check_branch
      %1785 = sbr.rel (%p1783) target = $region64
    $region63: #{forward.1} parent=5 // pred_region
      %s1786 = ssub.s32 %s15, 2
      // Predicated region
      $region65: #{forward.1} parent=63 // pred_check
        %p1787 = pneg %p243
      $region66: #{forward.1} parent=63 // pred_check_branch
        %1789 = sbr.rel (%p1787) target = $region68
      $region67: #{forward.1} parent=63 // pred_region
        %s1790 = smul.u32 8, %s21
        %p1791 = scmp.lt.s32.totalorder %s1790, 15
        %s1792 = scalar_select %p1791, %s1790, 15
        %s1793 = smul.addr %s1792, 8
        %s1794 = scalar_lea.vmem %s9, %s1793
      $region68: #{forward.1} parent=63 // pred_fallthru
        _
    $region64: #{forward.1} parent=5 // pred_fallthru
      _
  $region6: #{forward.1} parent=0 // loop_footer
    %s19 = sadd.s32 1, %s15
  $region7: #{forward.1} parent=0 // loop_footer_branch
    %14 = sbr.rel target = $region3
  $region8: #{forward.1} parent=0 // loop_exit
    _

</llo_original>
